<compile_context>
chip_gen: v6e
topology: v6e:2x2x1
jax: 0.10.0
libtpu: 0.0.40
codegen_flags: <defaults>
</compile_context>

<pallas_src>
import math
import functools

import numpy as np
import jax
import jax.numpy as jnp
from jax.experimental import pallas as pl
from jax.experimental.pallas import tpu as pltpu


# ---------------------------------------------------------------------------
# Relative position index (same math as the torch helper, done with numpy).
# ---------------------------------------------------------------------------
def get_relative_position_index(win_h: int, win_w: int) -> np.ndarray:
    coords = np.stack(np.meshgrid(np.arange(win_h), np.arange(win_w), indexing="ij"))
    coords_flatten = coords.reshape(2, -1)                                     # (2, N)
    relative_coords = coords_flatten[:, :, None] - coords_flatten[:, None, :]  # (2, N, N)
    relative_coords = relative_coords.transpose(1, 2, 0).copy()                # (N, N, 2)
    relative_coords[:, :, 0] += win_h - 1
    relative_coords[:, :, 1] += win_w - 1
    relative_coords[:, :, 0] *= 2 * win_w - 1
    return relative_coords.sum(-1)                                             # (N, N)


def precompute_rel_bias(rel_table, block_size, num_heads):
    """Gather + transpose the relative-position bias once: (H, N, N) f32."""
    N = block_size[0] * block_size[1]
    rel_idx = jnp.asarray(get_relative_position_index(*block_size).reshape(-1))
    bias = rel_table[rel_idx].reshape(N, N, num_heads)
    return jnp.transpose(bias, (2, 0, 1)).astype(jnp.float32)


# ---------------------------------------------------------------------------
# One-time parameter preparation (hoisted out of the per-call hot path).
# ---------------------------------------------------------------------------
def prepare_params(params, *, num_heads, qkdim, scale, block_size):
    """Fuse qk/v weights, fold the softmax scale into Q, gather the rel bias."""
    wq, wk = jnp.split(params["wqk"], 2, axis=1)           # (C, qkdim) each
    bq, bk = jnp.split(params["bqk"], 2, axis=1)           # (1, qkdim) each
    # Fused projection weight: [scaled Q | K | V]  -> one wide MXU matmul.
    wqkv = jnp.concatenate([wq * scale, wk, params["wv"]], axis=1).astype(jnp.bfloat16)
    bqkv = jnp.concatenate([bq * scale, bk, params["bv"]], axis=1).astype(jnp.float32)
    return {
        "wqkv": wqkv,                                        # (C, 2*qkdim + C) bf16
        "bqkv": bqkv,                                        # (1, 2*qkdim + C) f32
        "wproj": params["wproj"].astype(jnp.bfloat16),       # (C, C) bf16
        "bproj": params["bproj"].astype(jnp.float32),        # (1, C) f32
        "rel_bias": precompute_rel_bias(params["rel_table"], block_size, num_heads),
    }


# ---------------------------------------------------------------------------
# Tiling policy (VMEM-budgeted, mildly generation-aware).
# ---------------------------------------------------------------------------
def _dual_tensorcore_chip():
    """True on chips with two TensorCores behind one jax device (megacore)."""
    try:
        kind = jax.devices()[0].device_kind.lower()
    except Exception:
        return False
    return any(tag in kind for tag in ("v4", "v5p", "7"))


def _pick_batch_tile(B, N, C, Dq, H, *, vmem_budget_bytes, multi_tc):
    """Largest divisor of B whose per-step VMEM footprint fits the budget.

    On single-TC chips (v5e/v6e) this minimizes grid-step overhead; on dual-TC
    chips we additionally prefer an even step count so both cores stay busy.
    """
    def est(bt):
        R = bt * N
        io = 2 * (R * C * 4) * 2                                  # x + out slabs (dbl-buf, f32)
        w = 2 * (C * Dq * 2 + Dq * 4 + H * N * N * 4 + C * C * 2 + C * 4)
        tmp = R * Dq * 6 + bt * H * N * N * 4 * 3 + R * C * 10    # rough in-kernel temporaries
        return io + w + tmp

    divisors = [d for d in range(1, B + 1) if B % d == 0]
    valid = [d for d in divisors if est(d) <= vmem_budget_bytes] or [1]
    bt = max(valid)
    if multi_tc and (B // bt) % 2 == 1:
        even = [d for d in valid if (B // d) % 2 == 0]
        if even and max(even) * 2 >= bt:    # don't shrink the tile too much
            bt = max(even)
    return bt


# ---------------------------------------------------------------------------
# Pallas kernel: Bt batch elements per grid step.
# ---------------------------------------------------------------------------
def _rsa_kernel(x_ref, wqkv_ref, bqkv_ref, bias_ref, wp_ref, bp_ref, o_ref,
                *, num_heads, qkdim, dh, dv):
    Bt, N, C = x_ref.shape
    H = num_heads
    f32 = jnp.float32
    bf16 = jnp.bfloat16
    R = Bt * N

    # One (Bt*N, C) token slab per step; bf16 cast happens in-kernel (VPU, ~free).
    x2 = x_ref[...].reshape(R, C).astype(bf16)

    # Fused Q|K|V projection: ONE wide-output MXU matmul over the whole slab.
    # The Q columns and bias were pre-scaled by `scale` in prepare_params().
    qkv = jnp.dot(x2, wqkv_ref[...], preferred_element_type=f32) + bqkv_ref[...]

    # Static (small) head loop for the attention math.  For large H this would
    # move to a batched dot_general / a grid axis; at these head counts the
    # unrolled loop keeps everything on simple, well-supported einsum paths.
    outs = []
    for h in range(H):
        q = qkv[:, h * dh:(h + 1) * dh].astype(bf16).reshape(Bt, N, dh)
        k = qkv[:, qkdim + h * dh: qkdim + (h + 1) * dh].astype(bf16).reshape(Bt, N, dh)
        v = qkv[:, 2 * qkdim + h * dv: 2 * qkdim + (h + 1) * dv].astype(bf16).reshape(Bt, N, dv)

        # (scaled q) @ k^T + relative position bias, batched over Bt.
        a = jnp.einsum("bnd,bmd->bnm", q, k, preferred_element_type=f32)
        a = a + bias_ref[h][None, :, :]

        # NOTE: attn_drop / proj_drop are identity at p = 0 (inference); omitted.
        m = jnp.max(a, axis=-1, keepdims=True)
        p = jnp.exp(a - m)
        s = jnp.sum(p, axis=-1, keepdims=True)
        p = p * pl.reciprocal(s, approx=True)          # EUP reciprocal, not a divide

        outs.append(jnp.einsum("bnm,bmd->bnd", p.astype(bf16), v,
                               preferred_element_type=f32))      # (Bt, N, dv)

    # Concatenate heads along channels (h-major, matching torch's
    # transpose(1,2).reshape) and run ONE dense-K(=C) output projection.
    o2 = jnp.concatenate(outs, axis=-1).reshape(R, C).astype(bf16)
    y = jnp.dot(o2, wp_ref[...], preferred_element_type=f32) + bp_ref[...]
    o_ref[...] = y.reshape(Bt, N, C).astype(o_ref.dtype)


# ---------------------------------------------------------------------------
# Python wrapper
# ---------------------------------------------------------------------------
def relative_self_attention(x, prepared, *, num_heads, qkdim, batch_tile=None,
                            vmem_budget_bytes=24 * 1024 * 1024):
    """x: (B, N, C) float32, N == block_h * block_w; `prepared` from prepare_params."""
    B, N, C = x.shape
    H = num_heads
    assert C % H == 0 and qkdim % H == 0
    dh = qkdim // H
    dv = C // H

    wqkv, bqkv = prepared["wqkv"], prepared["bqkv"]
    wp, bp = prepared["wproj"], prepared["bproj"]
    rel_bias = prepared["rel_bias"]
    Dq = wqkv.shape[1]                                   # 2*qkdim + C

    Bt = batch_tile if batch_tile is not None else _pick_batch_tile(
        B, N, C, Dq, H, vmem_budget_bytes=vmem_budget_bytes,
        multi_tc=_dual_tensorcore_chip())
    assert B % Bt == 0
    grid = (B // Bt,)

    kernel = functools.partial(_rsa_kernel, num_heads=H, qkdim=qkdim, dh=dh, dv=dv)
    full = lambda a: pl.BlockSpec(a.shape, lambda b: (0,) * a.ndim)   # resident weights

    flops = (2 * B * N * C * Dq                 # fused qkv projection
             + 2 * B * H * N * N * (dh + dv)    # q @ k^T and attn @ v
             + 2 * B * N * C * C)               # output projection
    transcendentals = B * H * N * N
    _nbytes = lambda a: int(a.size) * a.dtype.itemsize
    bytes_accessed = (_nbytes(x) + B * N * C * 4
                      + sum(_nbytes(a) for a in (wqkv, bqkv, wp, bp, rel_bias)))

    return pl.pallas_call(
        kernel,
        out_shape=jax.ShapeDtypeStruct((B, N, C), jnp.float32),
        grid_spec=pltpu.PrefetchScalarGridSpec(
            num_scalar_prefetch=0,
            grid=grid,
            in_specs=[
                pl.BlockSpec((Bt, N, C), lambda b: (b, 0, 0)),    # x slab per step
                full(wqkv), full(bqkv), full(rel_bias), full(wp), full(bp),
            ],
            out_specs=pl.BlockSpec((Bt, N, C), lambda b: (b, 0, 0)),
        ),
        compiler_params=pltpu.CompilerParams(
            dimension_semantics=("parallel",),
            vmem_limit_bytes=48 * 1024 * 1024),
        cost_estimate=pl.CostEstimate(flops=int(flops),
                                      transcendentals=int(transcendentals),
                                      bytes_accessed=int(bytes_accessed)),
    )(x, wqkv, bqkv, rel_bias, wp, bp)


# ---------------------------------------------------------------------------
# Pure-JAX reference (mirrors the torch forward) for a correctness check.
# ---------------------------------------------------------------------------
def reference_forward(x, params, *, num_heads, qkdim, scale, block_size):
    B, N, C = x.shape
    H = num_heads
    dh = qkdim // H
    dv = C // H
    bias = precompute_rel_bias(params["rel_table"], block_size, H)      # (H, N, N)
    qk = x @ params["wqk"] + params["bqk"]                              # (B, N, 2*qkdim)
    qk = jnp.transpose(qk.reshape(B, N, 2, H, dh), (2, 0, 3, 1, 4))
    q, k = qk[0], qk[1]                                                 # (B, H, N, dh)
    v = jnp.transpose((x @ params["wv"] + params["bv"]).reshape(B, N, H, dv),
                      (0, 2, 1, 3))                                     # (B, H, N, dv)
    attn = (q * scale) @ jnp.swapaxes(k, -2, -1) + bias[None]
    attn = jax.nn.softmax(attn, axis=-1)
    out = jnp.transpose(attn @ v, (0, 2, 1, 3)).reshape(B, N, C)
    return out @ params["wproj"] + params["bproj"]


# ---------------------------------------------------------------------------
# Deterministic parameter init (shapes follow the torch module __init__).
# ---------------------------------------------------------------------------
def init_params(key, in_chs, num_groups, num_heads, block_size):
    qkdim = math.ceil(in_chs / num_groups / num_heads) * num_heads
    keys = jax.random.split(key, 7)
    table_rows = (2 * block_size[0] - 1) * (2 * block_size[1] - 1)
    params = {
        # trunc_normal(std=0.02) approximated with normal*0.02 (synthetic weights)
        "rel_table": 0.02 * jax.random.normal(keys[0], (table_rows, num_heads), jnp.float32),
        # Linear weights stored pre-transposed: (in, out)
        "wqk": 0.05 * jax.random.normal(keys[1], (in_chs, 2 * qkdim), jnp.float32),
        "bqk": 0.05 * jax.random.normal(keys[2], (1, 2 * qkdim), jnp.float32),
        "wv": 0.05 * jax.random.normal(keys[3], (in_chs, in_chs), jnp.float32),
        "bv": 0.05 * jax.random.normal(keys[4], (1, in_chs), jnp.float32),
        "wproj": 0.05 * jax.random.normal(keys[5], (in_chs, in_chs), jnp.float32),
        "bproj": 0.05 * jax.random.normal(keys[6], (1, in_chs), jnp.float32),
    }
    scale = (qkdim // num_heads) ** (-0.5)
    return params, qkdim, scale


if __name__ == "__main__":
    B = 8
    in_chs = 32
    num_groups = 1
    num_heads = 2
    block_size = (4, 4)
    N = block_size[0] * block_size[1]

    key = jax.random.PRNGKey(0)
    kx, kp = jax.random.split(key)
    x = jax.random.normal(kx, (B, N, in_chs), jnp.float32)

    params, qkdim, scale = init_params(kp, in_chs, num_groups, num_heads, block_size)

    # One-time parameter preparation (weight fusion, scale folding, bias gather).
    prepared = prepare_params(params, num_heads=num_heads, qkdim=qkdim,
                              scale=scale, block_size=block_size)

    out = relative_self_attention(x, prepared, num_heads=num_heads, qkdim=qkdim)
    out = jax.block_until_ready(out)

    ref = jax.block_until_ready(
        reference_forward(x, params, num_heads=num_heads, qkdim=qkdim,
                          scale=scale, block_size=block_size))

    assert out.shape == (B, N, in_chs)
    assert bool(jnp.all(jnp.isfinite(out)))
    max_err = float(jnp.max(jnp.abs(out - ref)))
    assert max_err < 5e-2, f"max abs error too large: {max_err}"
    print("KERNEL_OK")
</pallas_src>

<mosaic_0001>
module attributes {stable_mosaic.version = 11 : i64} {
  func.func @_rsa_kernel(%arg0: i32, %arg1: memref<8x16x32xf32, #tpu.memory_space<vmem>>, %arg2: memref<32x96xbf16, #tpu.memory_space<vmem>>, %arg3: memref<1x96xf32, #tpu.memory_space<vmem>>, %arg4: memref<2x16x16xf32, #tpu.memory_space<vmem>>, %arg5: memref<32x32xbf16, #tpu.memory_space<vmem>>, %arg6: memref<1x32xf32, #tpu.memory_space<vmem>>, %arg7: memref<8x16x32xf32, #tpu.memory_space<vmem>>) attributes {dimension_semantics = [#tpu.dimension_semantics<parallel>], iteration_bounds = array<i64: 1>, scalar_prefetch = 0 : i64, scratch_operands = 0 : i64, tpu.core_type = #tpu.core_type<tc>, window_params = [{transform_indices = @transform_0, window_bounds = array<i64: 8, 16, 32>}, {pipeline_mode = #tpu.pipeline_mode<synchronous>, transform_indices = @transform_1, window_bounds = array<i64: 32, 96>}, {pipeline_mode = #tpu.pipeline_mode<synchronous>, transform_indices = @transform_2, window_bounds = array<i64: 1, 96>}, {pipeline_mode = #tpu.pipeline_mode<synchronous>, transform_indices = @transform_3, window_bounds = array<i64: 2, 16, 16>}, {pipeline_mode = #tpu.pipeline_mode<synchronous>, transform_indices = @transform_4, window_bounds = array<i64: 32, 32>}, {pipeline_mode = #tpu.pipeline_mode<synchronous>, transform_indices = @transform_5, window_bounds = array<i64: 1, 32>}, {transform_indices = @transform_6, window_bounds = array<i64: 8, 16, 32>}]} {
    %c0 = arith.constant 0 : index
    %c0_0 = arith.constant 0 : index
    %c0_1 = arith.constant 0 : index
    %0 = vector.load %arg1[%c0, %c0_0, %c0_1] : memref<8x16x32xf32, #tpu.memory_space<vmem>>, vector<8x16x32xf32>
    %1 = vector.shape_cast %0 : vector<8x16x32xf32> to vector<128x32xf32>
    %2 = arith.truncf %1 : vector<128x32xf32> to vector<128x32xbf16>
    %c0_2 = arith.constant 0 : index
    %c0_3 = arith.constant 0 : index
    %3 = vector.load %arg2[%c0_2, %c0_3] : memref<32x96xbf16, #tpu.memory_space<vmem>>, vector<32x96xbf16>
    %cst = arith.constant dense<0.000000e+00> : vector<128x96xf32>
    %4 = tpu.matmul %2, %3, %cst {dimension_numbers = #tpu.dot_dimension_numbers<[1], [0], [0], [1], [0, 0, 1, 1], [], []>} : vector<128x32xbf16>, vector<32x96xbf16>, vector<128x96xf32> -> vector<128x96xf32>
    %c0_4 = arith.constant 0 : index
    %c0_5 = arith.constant 0 : index
    %5 = vector.load %arg3[%c0_4, %c0_5] : memref<1x96xf32, #tpu.memory_space<vmem>>, vector<1x96xf32>
    %6 = vector.broadcast %5 : vector<1x96xf32> to vector<128x96xf32>
    %7 = arith.addf %4, %6 : vector<128x96xf32>
    %8 = vector.extract_strided_slice %7 {offsets = [0, 0], sizes = [128, 16], strides = [1, 1]} : vector<128x96xf32> to vector<128x16xf32>
    %9 = arith.truncf %8 : vector<128x16xf32> to vector<128x16xbf16>
    %10 = vector.shape_cast %9 : vector<128x16xbf16> to vector<8x16x16xbf16>
    %11 = vector.extract_strided_slice %7 {offsets = [0, 32], sizes = [128, 16], strides = [1, 1]} : vector<128x96xf32> to vector<128x16xf32>
    %12 = arith.truncf %11 : vector<128x16xf32> to vector<128x16xbf16>
    %13 = vector.shape_cast %12 : vector<128x16xbf16> to vector<8x16x16xbf16>
    %14 = vector.extract_strided_slice %7 {offsets = [0, 64], sizes = [128, 16], strides = [1, 1]} : vector<128x96xf32> to vector<128x16xf32>
    %15 = arith.truncf %14 : vector<128x16xf32> to vector<128x16xbf16>
    %16 = vector.shape_cast %15 : vector<128x16xbf16> to vector<8x16x16xbf16>
    "tpu.trace_start"() <{level = 10 : i32, message = "bnd,bmd->bnm"}> : () -> ()
    %cst_6 = arith.constant dense<0.000000e+00> : vector<8x16x16xf32>
    %17 = tpu.matmul %10, %13, %cst_6 {dimension_numbers = #tpu.dot_dimension_numbers<[2], [2], [1], [1], [0, 0, 0, 1, 1, 1], [0], [0]>} : vector<8x16x16xbf16>, vector<8x16x16xbf16>, vector<8x16x16xf32> -> vector<8x16x16xf32>
    "tpu.trace_stop"() : () -> ()
    %c0_7 = arith.constant 0 : index
    %c0_8 = arith.constant 0 : index
    %c0_9 = arith.constant 0 : index
    %18 = vector.load %arg4[%c0_7, %c0_8, %c0_9] : memref<2x16x16xf32, #tpu.memory_space<vmem>>, vector<1x16x16xf32>
    %19 = vector.shape_cast %18 : vector<1x16x16xf32> to vector<16x16xf32>
    %20 = vector.shape_cast %19 : vector<16x16xf32> to vector<1x16x16xf32>
    %21 = vector.broadcast %20 : vector<1x16x16xf32> to vector<8x16x16xf32>
    %22 = arith.addf %17, %21 : vector<8x16x16xf32>
    %cst_10 = arith.constant dense<0xFF800000> : vector<8x16xf32>
    %23 = vector.multi_reduction <maximumf>, %22, %cst_10 [2] : vector<8x16x16xf32> to vector<8x16xf32>
    %24 = vector.shape_cast %23 : vector<8x16xf32> to vector<8x16x1xf32>
    %25 = vector.broadcast %24 : vector<8x16x1xf32> to vector<8x16x16xf32>
    %26 = arith.subf %22, %25 : vector<8x16x16xf32>
    %27 = math.exp %26 : vector<8x16x16xf32>
    %cst_11 = arith.constant dense<0.000000e+00> : vector<8x16xf32>
    %28 = vector.multi_reduction <add>, %27, %cst_11 [2] : vector<8x16x16xf32> to vector<8x16xf32>
    %29 = vector.shape_cast %28 : vector<8x16xf32> to vector<8x16x1xf32>
    %30 = tpu.reciprocal %29 {approx = true} : vector<8x16x1xf32> -> vector<8x16x1xf32>
    %31 = vector.broadcast %30 : vector<8x16x1xf32> to vector<8x16x16xf32>
    %32 = arith.mulf %27, %31 : vector<8x16x16xf32>
    %33 = arith.truncf %32 : vector<8x16x16xf32> to vector<8x16x16xbf16>
    "tpu.trace_start"() <{level = 10 : i32, message = "bnm,bmd->bnd"}> : () -> ()
    %cst_12 = arith.constant dense<0.000000e+00> : vector<8x16x16xf32>
    %34 = tpu.matmul %33, %16, %cst_12 {dimension_numbers = #tpu.dot_dimension_numbers<[2], [1], [1], [2], [0, 0, 0, 1, 1, 2], [0], [0]>} : vector<8x16x16xbf16>, vector<8x16x16xbf16>, vector<8x16x16xf32> -> vector<8x16x16xf32>
    "tpu.trace_stop"() : () -> ()
    %35 = vector.extract_strided_slice %7 {offsets = [0, 16], sizes = [128, 16], strides = [1, 1]} : vector<128x96xf32> to vector<128x16xf32>
    %36 = arith.truncf %35 : vector<128x16xf32> to vector<128x16xbf16>
    %37 = vector.shape_cast %36 : vector<128x16xbf16> to vector<8x16x16xbf16>
    %38 = vector.extract_strided_slice %7 {offsets = [0, 48], sizes = [128, 16], strides = [1, 1]} : vector<128x96xf32> to vector<128x16xf32>
    %39 = arith.truncf %38 : vector<128x16xf32> to vector<128x16xbf16>
    %40 = vector.shape_cast %39 : vector<128x16xbf16> to vector<8x16x16xbf16>
    %41 = vector.extract_strided_slice %7 {offsets = [0, 80], sizes = [128, 16], strides = [1, 1]} : vector<128x96xf32> to vector<128x16xf32>
    %42 = arith.truncf %41 : vector<128x16xf32> to vector<128x16xbf16>
    %43 = vector.shape_cast %42 : vector<128x16xbf16> to vector<8x16x16xbf16>
    "tpu.trace_start"() <{level = 10 : i32, message = "bnd,bmd->bnm"}> : () -> ()
    %cst_13 = arith.constant dense<0.000000e+00> : vector<8x16x16xf32>
    %44 = tpu.matmul %37, %40, %cst_13 {dimension_numbers = #tpu.dot_dimension_numbers<[2], [2], [1], [1], [0, 0, 0, 1, 1, 1], [0], [0]>} : vector<8x16x16xbf16>, vector<8x16x16xbf16>, vector<8x16x16xf32> -> vector<8x16x16xf32>
    "tpu.trace_stop"() : () -> ()
    %c1 = arith.constant 1 : index
    %c0_14 = arith.constant 0 : index
    %c0_15 = arith.constant 0 : index
    %45 = vector.load %arg4[%c1, %c0_14, %c0_15] : memref<2x16x16xf32, #tpu.memory_space<vmem>>, vector<1x16x16xf32>
    %46 = vector.shape_cast %45 : vector<1x16x16xf32> to vector<16x16xf32>
    %47 = vector.shape_cast %46 : vector<16x16xf32> to vector<1x16x16xf32>
    %48 = vector.broadcast %47 : vector<1x16x16xf32> to vector<8x16x16xf32>
    %49 = arith.addf %44, %48 : vector<8x16x16xf32>
    %cst_16 = arith.constant dense<0xFF800000> : vector<8x16xf32>
    %50 = vector.multi_reduction <maximumf>, %49, %cst_16 [2] : vector<8x16x16xf32> to vector<8x16xf32>
    %51 = vector.shape_cast %50 : vector<8x16xf32> to vector<8x16x1xf32>
    %52 = vector.broadcast %51 : vector<8x16x1xf32> to vector<8x16x16xf32>
    %53 = arith.subf %49, %52 : vector<8x16x16xf32>
    %54 = math.exp %53 : vector<8x16x16xf32>
    %cst_17 = arith.constant dense<0.000000e+00> : vector<8x16xf32>
    %55 = vector.multi_reduction <add>, %54, %cst_17 [2] : vector<8x16x16xf32> to vector<8x16xf32>
    %56 = vector.shape_cast %55 : vector<8x16xf32> to vector<8x16x1xf32>
    %57 = tpu.reciprocal %56 {approx = true} : vector<8x16x1xf32> -> vector<8x16x1xf32>
    %58 = vector.broadcast %57 : vector<8x16x1xf32> to vector<8x16x16xf32>
    %59 = arith.mulf %54, %58 : vector<8x16x16xf32>
    %60 = arith.truncf %59 : vector<8x16x16xf32> to vector<8x16x16xbf16>
    "tpu.trace_start"() <{level = 10 : i32, message = "bnm,bmd->bnd"}> : () -> ()
    %cst_18 = arith.constant dense<0.000000e+00> : vector<8x16x16xf32>
    %61 = tpu.matmul %60, %43, %cst_18 {dimension_numbers = #tpu.dot_dimension_numbers<[2], [1], [1], [2], [0, 0, 0, 1, 1, 2], [0], [0]>} : vector<8x16x16xbf16>, vector<8x16x16xbf16>, vector<8x16x16xf32> -> vector<8x16x16xf32>
    "tpu.trace_stop"() : () -> ()
    %62 = tpu.concatenate %34, %61 in 2 : vector<8x16x16xf32>, vector<8x16x16xf32> -> vector<8x16x32xf32>
    %63 = vector.shape_cast %62 : vector<8x16x32xf32> to vector<128x32xf32>
    %64 = arith.truncf %63 : vector<128x32xf32> to vector<128x32xbf16>
    %c0_19 = arith.constant 0 : index
    %c0_20 = arith.constant 0 : index
    %65 = vector.load %arg5[%c0_19, %c0_20] : memref<32x32xbf16, #tpu.memory_space<vmem>>, vector<32x32xbf16>
    %cst_21 = arith.constant dense<0.000000e+00> : vector<128x32xf32>
    %66 = tpu.matmul %64, %65, %cst_21 {dimension_numbers = #tpu.dot_dimension_numbers<[1], [0], [0], [1], [0, 0, 1, 1], [], []>} : vector<128x32xbf16>, vector<32x32xbf16>, vector<128x32xf32> -> vector<128x32xf32>
    %c0_22 = arith.constant 0 : index
    %c0_23 = arith.constant 0 : index
    %67 = vector.load %arg6[%c0_22, %c0_23] : memref<1x32xf32, #tpu.memory_space<vmem>>, vector<1x32xf32>
    %68 = vector.broadcast %67 : vector<1x32xf32> to vector<128x32xf32>
    %69 = arith.addf %66, %68 : vector<128x32xf32>
    %70 = vector.shape_cast %69 : vector<128x32xf32> to vector<8x16x32xf32>
    %c0_24 = arith.constant 0 : index
    %c0_25 = arith.constant 0 : index
    %c0_26 = arith.constant 0 : index
    %71 = vector.load %arg7[%c0_24, %c0_25, %c0_26] : memref<8x16x32xf32, #tpu.memory_space<vmem>>, vector<8x16x32xf32>
    tpu.vector_store %arg7[%c0_24, %c0_25, %c0_26], %70 {strides = array<i32>} : memref<8x16x32xf32, #tpu.memory_space<vmem>>, vector<8x16x32xf32>,
    return
  }
  func.func @transform_0(%arg0: i32) -> (i32, i32, i32) {
    %c0_i32 = arith.constant 0 : i32
    %c0_i32_0 = arith.constant 0 : i32
    %c0_i32_1 = arith.constant 0 : i32
    return %arg0, %c0_i32, %c0_i32_0 : i32, i32, i32
  }
  func.func @transform_1(%arg0: i32) -> (i32, i32) {
    %c0_i32 = arith.constant 0 : i32
    %c0_i32_0 = arith.constant 0 : i32
    %c0_i32_1 = arith.constant 0 : i32
    return %c0_i32, %c0_i32_0 : i32, i32
  }
  func.func @transform_2(%arg0: i32) -> (i32, i32) {
    %c0_i32 = arith.constant 0 : i32
    %c0_i32_0 = arith.constant 0 : i32
    %c0_i32_1 = arith.constant 0 : i32
    return %c0_i32, %c0_i32_0 : i32, i32
  }
  func.func @transform_3(%arg0: i32) -> (i32, i32, i32) {
    %c0_i32 = arith.constant 0 : i32
    %c0_i32_0 = arith.constant 0 : i32
    %c0_i32_1 = arith.constant 0 : i32
    %c0_i32_2 = arith.constant 0 : i32
    return %c0_i32, %c0_i32_0, %c0_i32_1 : i32, i32, i32
  }
  func.func @transform_4(%arg0: i32) -> (i32, i32) {
    %c0_i32 = arith.constant 0 : i32
    %c0_i32_0 = arith.constant 0 : i32
    %c0_i32_1 = arith.constant 0 : i32
    return %c0_i32, %c0_i32_0 : i32, i32
  }
  func.func @transform_5(%arg0: i32) -> (i32, i32) {
    %c0_i32 = arith.constant 0 : i32
    %c0_i32_0 = arith.constant 0 : i32
    %c0_i32_1 = arith.constant 0 : i32
    return %c0_i32, %c0_i32_0 : i32, i32
  }
  func.func @transform_6(%arg0: i32) -> (i32, i32, i32) {
    %c0_i32 = arith.constant 0 : i32
    %c0_i32_0 = arith.constant 0 : i32
    %c0_i32_1 = arith.constant 0 : i32
    return %arg0, %c0_i32, %c0_i32_0 : i32, i32, i32
  }
}

</mosaic_0001>

<llo_original>
// kernel: tpu_custom_call.1
$region0: #{tpu_custom_call.1}
  #allocation0 [shape = 'u32[]', space=smem, size = 0x4, offset = 0x4, fixed_abs, tag = 'smem constant byte address 0x4 - core index']
  #allocation1 [shape = 'u32[144,128]{1,0:T(1,128)}', space=vmem, size = 0x12000, scoped, tag = 'internal scratch']
  %s0 = inlined_call_operand.hbm [shape: f32[8,16,32], index: 0, kind: input, shape index: {}]
  %s1 = inlined_call_operand.hbm [shape: bf16[32,96], index: 1, kind: input, shape index: {}]
  %s2 = inlined_call_operand.vmem [shape: f32[1,96], index: 2, kind: input, shape index: {}]
  %s3 = inlined_call_operand.hbm [shape: f32[2,16,16], index: 3, kind: input, shape index: {}]
  %s4 = inlined_call_operand.hbm [shape: bf16[32,32], index: 4, kind: input, shape index: {}]
  %s5 = inlined_call_operand.vmem [shape: f32[1,32], index: 5, kind: input, shape index: {}]
  %s6 = inlined_call_operand.hbm [shape: f32[8,16,32], index: 6, kind: output, shape index: {}]
  %s7 = sld [smem:[#allocation0]]
  $region50: #{tpu_custom_call.1} parent=0
    _
  %s9 = ssub.s32 1, %s7
  %s10 = scalar_select 0, %s9, %s7
  $region1: #{tpu_custom_call.1} parent=0
    #allocation2 [shape = 'u8[65536]{0}', space=vmem, size = 0x10000, scoped, tag = 'input window, operand 0, single buffered']
    #allocation3 [shape = 's32[1]{0}', space=sflag, size = 0x4, scoped, tag = 'scoped memory for tpu_custom_call.1']
    #allocation4 [shape = 's32[1]{0}', space=sflag, size = 0x4, scoped, tag = 'scoped memory for tpu_custom_call.1']
    #allocation5 [shape = 'u8[8192]{0}', space=vmem, size = 0x2000, scoped, tag = 'input window, operand 1, single buffered']
    #allocation6 [shape = 's32[1]{0}', space=sflag, size = 0x4, scoped, tag = 'scoped memory for tpu_custom_call.1']
    #allocation7 [shape = 'u8[16384]{0}', space=vmem, size = 0x4000, scoped, tag = 'input window, operand 3, single buffered']
    #allocation8 [shape = 'u8[8192]{0}', space=vmem, size = 0x2000, scoped, tag = 'input window, operand 4, single buffered']
    #allocation9 [shape = 's32[1]{0}', space=sflag, size = 0x4, scoped, tag = 'scoped memory for tpu_custom_call.1']
    #allocation10 [shape = 'u8[65536]{0}', space=vmem, size = 0x10000, scoped, tag = 'output window, operand 0, single buffered']
    %11 = vsyncpa [#allocation3], 0
    %12 = vsyncpa [#allocation6], 0
    %13 = vsyncpa [#allocation9], 0
    %14 = vsyncpa [#allocation4], 0
    // Predicated region
    $region2: #{tpu_custom_call.1} parent=1 // pred_check
      _
    $region3: #{tpu_custom_call.1} parent=1 // pred_check_branch
      %16 = sbr.rel (0) target = $region5
    $region4: #{tpu_custom_call.1} parent=1 // pred_region
      %s18 = ssub.s32 2048, 2048
      %19 = vsyncadd [#allocation3], %s18
      %s20 = sshll.u32 [#allocation2], 4
      %s21 = int_to_ptr.vmem [resolvable:$true] %s20
      %26 = dma.hbm_to_vmem [thread:$0]  %s0, 2048, %s21, [#allocation3], 128, 128, 8
    $region5: #{tpu_custom_call.1} parent=1 // pred_fallthru
      _
    // Predicated region
    $region6: #{tpu_custom_call.1} parent=1 // pred_check
      _
    $region7: #{tpu_custom_call.1} parent=1 // pred_check_branch
      %28 = sbr.rel (0) target = $region9
    $region8: #{tpu_custom_call.1} parent=1 // pred_region
      %s30 = ssub.s32 256, 256
      %31 = vsyncadd [#allocation6], %s30
      %s32 = sshll.u32 [#allocation5], 4
      %s33 = int_to_ptr.vmem [resolvable:$true] %s32
      %38 = dma.hbm_to_vmem [thread:$0]  %s1, 256, %s33, [#allocation6], 64, 64, 4
    $region9: #{tpu_custom_call.1} parent=1 // pred_fallthru
      _
    // Predicated region
    $region10: #{tpu_custom_call.1} parent=1 // pred_check
      _
    $region11: #{tpu_custom_call.1} parent=1 // pred_check_branch
      %40 = sbr.rel (0) target = $region13
    $region12: #{tpu_custom_call.1} parent=1 // pred_region
      _
    $region13: #{tpu_custom_call.1} parent=1 // pred_fallthru
      _
    // Predicated region
    $region14: #{tpu_custom_call.1} parent=1 // pred_check
      _
    $region15: #{tpu_custom_call.1} parent=1 // pred_check_branch
      %42 = sbr.rel (0) target = $region17
    $region16: #{tpu_custom_call.1} parent=1 // pred_region
      %s44 = ssub.s32 512, 512
      %45 = vsyncadd [#allocation6], %s44
      %s46 = sshll.u32 [#allocation7], 4
      %s47 = int_to_ptr.vmem [resolvable:$true] %s46
      %52 = dma.hbm_to_vmem [thread:$0]  %s3, 512, %s47, [#allocation6], 128, 128, 8
    $region17: #{tpu_custom_call.1} parent=1 // pred_fallthru
      _
    // Predicated region
    $region18: #{tpu_custom_call.1} parent=1 // pred_check
      _
    $region19: #{tpu_custom_call.1} parent=1 // pred_check_branch
      %54 = sbr.rel (0) target = $region21
    $region20: #{tpu_custom_call.1} parent=1 // pred_region
      %s56 = ssub.s32 256, 256
      %57 = vsyncadd [#allocation9], %s56
      %s58 = sshll.u32 [#allocation8], 4
      %s59 = int_to_ptr.vmem [resolvable:$true] %s58
      %64 = dma.hbm_to_vmem [thread:$0]  %s4, 256, %s59, [#allocation9], 64, 64, 4
    $region21: #{tpu_custom_call.1} parent=1 // pred_fallthru
      _
    // Predicated region
    $region22: #{tpu_custom_call.1} parent=1 // pred_check
      _
    $region23: #{tpu_custom_call.1} parent=1 // pred_check_branch
      %66 = sbr.rel (0) target = $region25
    $region24: #{tpu_custom_call.1} parent=1 // pred_region
      _
    $region25: #{tpu_custom_call.1} parent=1 // pred_fallthru
      _
    // Predicated region
    $region26: #{tpu_custom_call.1} parent=1 // pred_check
      _
    $region27: #{tpu_custom_call.1} parent=1 // pred_check_branch
      %68 = sbr.rel (0) target = $region29
    $region28: #{tpu_custom_call.1} parent=1 // pred_region
      %69 = dma.done [#allocation3], 2048
    $region29: #{tpu_custom_call.1} parent=1 // pred_fallthru
      _
    // Predicated region
    $region30: #{tpu_custom_call.1} parent=1 // pred_check
      _
    $region31: #{tpu_custom_call.1} parent=1 // pred_check_branch
      %71 = sbr.rel (0) target = $region33
    $region32: #{tpu_custom_call.1} parent=1 // pred_region
      %72 = dma.done [#allocation6], 256
    $region33: #{tpu_custom_call.1} parent=1 // pred_fallthru
      _
    // Predicated region
    $region34: #{tpu_custom_call.1} parent=1 // pred_check
      _
    $region35: #{tpu_custom_call.1} parent=1 // pred_check_branch
      %74 = sbr.rel (0) target = $region37
    $region36: #{tpu_custom_call.1} parent=1 // pred_region
      %75 = dma.done [#allocation6], 512
    $region37: #{tpu_custom_call.1} parent=1 // pred_fallthru
      _
    // Predicated region
    $region38: #{tpu_custom_call.1} parent=1 // pred_check
      _
    $region39: #{tpu_custom_call.1} parent=1 // pred_check_branch
      %77 = sbr.rel (0) target = $region41
    $region40: #{tpu_custom_call.1} parent=1 // pred_region
      %78 = dma.done [#allocation9], 256
    $region41: #{tpu_custom_call.1} parent=1 // pred_fallthru
      _
    %v80 = vld [vmem:[#allocation2] sm:$0xff]
    %v81 = vld [vmem:[#allocation2 + $0x8] sm:$0xff]
    %v82 = vld [vmem:[#allocation2 + $0x10] sm:$0xff]
    %v83 = vld [vmem:[#allocation2 + $0x18] sm:$0xff]
    %v84 = vld [vmem:[#allocation2 + $0x20] sm:$0xff]
    %v85 = vld [vmem:[#allocation2 + $0x28] sm:$0xff]
    %v86 = vld [vmem:[#allocation2 + $0x30] sm:$0xff]
    %v87 = vld [vmem:[#allocation2 + $0x38] sm:$0xff]
    %v88 = vld [vmem:[#allocation2 + $0x40] sm:$0xff]
    %v89 = vld [vmem:[#allocation2 + $0x48] sm:$0xff]
    %v90 = vld [vmem:[#allocation2 + $0x50] sm:$0xff]
    %v91 = vld [vmem:[#allocation2 + $0x58] sm:$0xff]
    %v92 = vld [vmem:[#allocation2 + $0x60] sm:$0xff]
    %v93 = vld [vmem:[#allocation2 + $0x68] sm:$0xff]
    %v94 = vld [vmem:[#allocation2 + $0x70] sm:$0xff]
    %v95 = vld [vmem:[#allocation2 + $0x78] sm:$0xff]
    %v96 = vpack.c.bf16 %v81, %v80
    %v97 = vpack.c.bf16 %v83, %v82
    %v98 = vpack.c.bf16 %v85, %v84
    %v99 = vpack.c.bf16 %v87, %v86
    %v100 = vpack.c.bf16 %v89, %v88
    %v101 = vpack.c.bf16 %v91, %v90
    %v102 = vpack.c.bf16 %v93, %v92
    %v103 = vpack.c.bf16 %v95, %v94
    %v104 = vld [vmem:[#allocation5] sm:$0xf]
    %v105 = vld [vmem:[#allocation5 + $0x4] sm:$0xf]
    %v106 = vld [vmem:[#allocation5 + $0x8] sm:$0xf]
    %v107 = vld [vmem:[#allocation5 + $0xc] sm:$0xf]
    %v108 = vld [vmem:[%s2] sm:$0x1]
    %v110 = vlaneseq
    %v111 = vshrl.u32 %v110, 7
    %v112 = vsub.s32 0, %v111
    %v113 = vrot.slane %v108, %v112
    %v119 = vunpack.c.l.b16 %v104
    %v120 = vunpack.c.l.b16 %v105
    %v121 = vunpack.c.l.b16 %v106
    %v122 = vunpack.c.l.b16 %v107
    %v123 = vpack.c.b16 %v120, %v119
    %v124 = vpack.c.b16 %v122, %v121
    %vm127 = vcmask 261120
    %v129 = vsel %vm127, %v96, 0
    %v132 = vsel %vm127, %v97, 0
    %v135 = vsel %vm127, %v98, 0
    %v138 = vsel %vm127, %v99, 0
    %v141 = vsel %vm127, %v100, 0
    %v144 = vsel %vm127, %v101, 0
    %v147 = vsel %vm127, %v102, 0
    %v150 = vsel %vm127, %v103, 0
    %152 = vmatprep.subr.bf16.mxu0 0
    %153 = vmatpush1.bf16.msra.mxu0 0
    %154 = vmatprep.subr.bf16.mxu0 0
    %155 = vmatpush1.bf16.msra.mxu0 0
    %156 = vmatprep.subr.bf16.mxu0 0
    %157 = vmatpush1.bf16.msra.mxu0 0
    %158 = vmatprep.subr.bf16.mxu0 0
    %159 = vmatpush1.bf16.msra.mxu0 0
    %160 = vmatprep.subr.bf16.mxu0 0
    %161 = vmatpush1.bf16.msra.mxu0 0
    %162 = vmatprep.subr.bf16.mxu0 0
    %163 = vmatpush1.bf16.msra.mxu0 0
    %164 = vmatprep.subr.bf16.mxu0 0
    %165 = vmatpush1.bf16.msra.mxu0 %v124
    %166 = vmatprep.subr.bf16.mxu0 0
    %167 = vmatpush1.bf16.msra.mxu0 %v123
    %168 = vmatprep.subr.bf16.mxu0 0
    %169 = vmatpush2.bf16.msra.mxu0 0
    %170 = vmatprep.subr.bf16.mxu0 0
    %171 = vmatpush2.bf16.msra.mxu0 0
    %172 = vmatprep.subr.bf16.mxu0 0
    %173 = vmatpush2.bf16.msra.mxu0 0
    %174 = vmatprep.subr.bf16.mxu0 0
    %175 = vmatpush2.bf16.msra.mxu0 0
    %176 = vmatprep.subr.bf16.mxu0 0
    %177 = vmatpush2.bf16.msra.mxu0 0
    %178 = vmatprep.subr.bf16.mxu0 0
    %179 = vmatpush2.bf16.msra.mxu0 0
    %180 = vmatprep.subr.bf16.mxu0 0
    %181 = vmatpush2.bf16.msra.mxu0 0
    %182 = vmatprep.subr.bf16.mxu0 0
    %183 = vmatpush2.bf16.msra.mxu0 0
    %184 = vmatprep.mubr.bf16.mxu0 0
    %185 = vmatmul.mubr.bf16.gmra.mxu0 %v129
    %v186 = vpop.f32.mrf.mxu0
    %v187 = vadd.f32 %v113, %v186
    %v188 = vpop.f32.mrf.mxu0
    %v189 = vpop.f32.mrf.mxu0
    %v190 = vadd.f32 %v113, %v189
    %v191 = vpop.f32.mrf.mxu0
    %192 = vmatprep.mubr.bf16.mxu0 0
    %193 = vmatmul.mubr.bf16.gmra.mxu0 %v132
    %v194 = vpop.f32.mrf.mxu0
    %v195 = vadd.f32 %v113, %v194
    %v196 = vpop.f32.mrf.mxu0
    %v197 = vpop.f32.mrf.mxu0
    %v198 = vadd.f32 %v113, %v197
    %v199 = vpop.f32.mrf.mxu0
    %200 = vmatprep.mubr.bf16.mxu0 0
    %201 = vmatmul.mubr.bf16.gmra.mxu0 %v135
    %v202 = vpop.f32.mrf.mxu0
    %v203 = vadd.f32 %v113, %v202
    %v204 = vpop.f32.mrf.mxu0
    %v205 = vpop.f32.mrf.mxu0
    %v206 = vadd.f32 %v113, %v205
    %v207 = vpop.f32.mrf.mxu0
    %208 = vmatprep.mubr.bf16.mxu0 0
    %209 = vmatmul.mubr.bf16.gmra.mxu0 %v138
    %v210 = vpop.f32.mrf.mxu0
    %v211 = vadd.f32 %v113, %v210
    %v212 = vpop.f32.mrf.mxu0
    %v213 = vpop.f32.mrf.mxu0
    %v214 = vadd.f32 %v113, %v213
    %v215 = vpop.f32.mrf.mxu0
    %216 = vmatprep.mubr.bf16.mxu0 0
    %217 = vmatmul.mubr.bf16.gmra.mxu0 %v141
    %v218 = vpop.f32.mrf.mxu0
    %v219 = vadd.f32 %v113, %v218
    %v220 = vpop.f32.mrf.mxu0
    %v221 = vpop.f32.mrf.mxu0
    %v222 = vadd.f32 %v113, %v221
    %v223 = vpop.f32.mrf.mxu0
    %224 = vmatprep.mubr.bf16.mxu0 0
    %225 = vmatmul.mubr.bf16.gmra.mxu0 %v144
    %v226 = vpop.f32.mrf.mxu0
    %v227 = vadd.f32 %v113, %v226
    %v228 = vpop.f32.mrf.mxu0
    %v229 = vpop.f32.mrf.mxu0
    %v230 = vadd.f32 %v113, %v229
    %v231 = vpop.f32.mrf.mxu0
    %232 = vmatprep.mubr.bf16.mxu0 0
    %233 = vmatmul.mubr.bf16.gmra.mxu0 %v147
    %v234 = vpop.f32.mrf.mxu0
    %v235 = vadd.f32 %v113, %v234
    %v236 = vpop.f32.mrf.mxu0
    %v237 = vpop.f32.mrf.mxu0
    %v238 = vadd.f32 %v113, %v237
    %v239 = vpop.f32.mrf.mxu0
    %240 = vmatprep.mubr.bf16.mxu0 0
    %241 = vmatmul.mubr.bf16.gmra.mxu0 %v150
    %v242 = vpop.f32.mrf.mxu0
    %v243 = vadd.f32 %v113, %v242
    %v244 = vpop.f32.mrf.mxu0
    %v245 = vpop.f32.mrf.mxu0
    %v246 = vadd.f32 %v113, %v245
    %v247 = vpop.f32.mrf.mxu0
    %248 = vdwg.mxu0
    %v249 = vpack.c.bf16 %v190, %v187
    %v250 = vpack.c.bf16 %v198, %v195
    %v251 = vpack.c.bf16 %v206, %v203
    %v252 = vpack.c.bf16 %v214, %v211
    %v253 = vpack.c.bf16 %v222, %v219
    %v254 = vpack.c.bf16 %v230, %v227
    %v255 = vpack.c.bf16 %v238, %v235
    %v256 = vpack.c.bf16 %v246, %v243
    %v257 = vld [vmem:[#allocation7] sm:$0xff]
    %v258 = vld [vmem:[#allocation7 + $0x8] sm:$0xff]
    %260 = vrot.lane.b32.xlu0 %v249, 96
    %v261 = vpop.permute.xlu0 %260
    %vm262 = vcmask 130048
    %v264 = vsel %vm262, %v249, 0
    %v267 = vsel %vm262, %v261, 0
    %269 = vmatprep.subr.bf16.mxu0 0
    %270 = vmatpush1.bf16.xpose.msra.mxu0 0
    %271 = vmatprep.subr.bf16.mxu0 0
    %272 = vmatpush1.bf16.xpose.msra.mxu0 0
    %273 = vmatprep.subr.bf16.mxu0 0
    %274 = vmatpush1.bf16.xpose.msra.mxu0 0
    %275 = vmatprep.subr.bf16.mxu0 0
    %276 = vmatpush1.bf16.xpose.msra.mxu0 0
    %277 = vmatprep.subr.bf16.mxu0 0
    %278 = vmatpush1.bf16.xpose.msra.mxu0 0
    %279 = vmatprep.subr.bf16.mxu0 0
    %280 = vmatpush1.bf16.xpose.msra.mxu0 0
    %281 = vmatprep.subr.bf16.mxu0 0
    %282 = vmatpush1.bf16.xpose.msra.mxu0 0
    %283 = vmatprep.subr.bf16.mxu0 0
    %284 = vmatpush1.bf16.xpose.msra.mxu0 %v267
    %285 = vmatprep.subr.bf16.mxu0 0
    %286 = vmatpush2.bf16.xpose.msra.mxu0 0
    %287 = vmatprep.subr.bf16.mxu0 0
    %288 = vmatpush2.bf16.xpose.msra.mxu0 0
    %289 = vmatprep.subr.bf16.mxu0 0
    %290 = vmatpush2.bf16.xpose.msra.mxu0 0
    %291 = vmatprep.subr.bf16.mxu0 0
    %292 = vmatpush2.bf16.xpose.msra.mxu0 0
    %293 = vmatprep.subr.bf16.mxu0 0
    %294 = vmatpush2.bf16.xpose.msra.mxu0 0
    %295 = vmatprep.subr.bf16.mxu0 0
    %296 = vmatpush2.bf16.xpose.msra.mxu0 0
    %297 = vmatprep.subr.bf16.mxu0 0
    %298 = vmatpush2.bf16.xpose.msra.mxu0 0
    %299 = vmatprep.subr.bf16.mxu0 0
    %300 = vmatpush2.bf16.xpose.msra.mxu0 0
    %301 = vmatprep.mubr.bf16.mxu0 0
    %302 = vmatmul.mubr.bf16.gmra.mxu0 %v264
    %v303 = vpop.f32.mrf.mxu0
    %v304 = vadd.f32 %v257, %v303
    %v305 = vpop.f32.mrf.mxu0
    %v306 = vpop.f32.mrf.mxu0
    %v307 = vadd.f32 %v258, %v306
    %v308 = vpop.f32.mrf.mxu0
    %309 = vdwg.mxu0
    %311 = vrot.lane.b32.xlu0 %v250, 96
    %v312 = vpop.permute.xlu0 %311
    %v314 = vsel %vm262, %v250, 0
    %v317 = vsel %vm262, %v312, 0
    %319 = vmatprep.subr.bf16.mxu0 0
    %320 = vmatpush1.bf16.xpose.msra.mxu0 0
    %321 = vmatprep.subr.bf16.mxu0 0
    %322 = vmatpush1.bf16.xpose.msra.mxu0 0
    %323 = vmatprep.subr.bf16.mxu0 0
    %324 = vmatpush1.bf16.xpose.msra.mxu0 0
    %325 = vmatprep.subr.bf16.mxu0 0
    %326 = vmatpush1.bf16.xpose.msra.mxu0 0
    %327 = vmatprep.subr.bf16.mxu0 0
    %328 = vmatpush1.bf16.xpose.msra.mxu0 0
    %329 = vmatprep.subr.bf16.mxu0 0
    %330 = vmatpush1.bf16.xpose.msra.mxu0 0
    %331 = vmatprep.subr.bf16.mxu0 0
    %332 = vmatpush1.bf16.xpose.msra.mxu0 0
    %333 = vmatprep.subr.bf16.mxu0 0
    %334 = vmatpush1.bf16.xpose.msra.mxu0 %v317
    %335 = vmatprep.subr.bf16.mxu0 0
    %336 = vmatpush2.bf16.xpose.msra.mxu0 0
    %337 = vmatprep.subr.bf16.mxu0 0
    %338 = vmatpush2.bf16.xpose.msra.mxu0 0
    %339 = vmatprep.subr.bf16.mxu0 0
    %340 = vmatpush2.bf16.xpose.msra.mxu0 0
    %341 = vmatprep.subr.bf16.mxu0 0
    %342 = vmatpush2.bf16.xpose.msra.mxu0 0
    %343 = vmatprep.subr.bf16.mxu0 0
    %344 = vmatpush2.bf16.xpose.msra.mxu0 0
    %345 = vmatprep.subr.bf16.mxu0 0
    %346 = vmatpush2.bf16.xpose.msra.mxu0 0
    %347 = vmatprep.subr.bf16.mxu0 0
    %348 = vmatpush2.bf16.xpose.msra.mxu0 0
    %349 = vmatprep.subr.bf16.mxu0 0
    %350 = vmatpush2.bf16.xpose.msra.mxu0 0
    %351 = vmatprep.mubr.bf16.mxu0 0
    %352 = vmatmul.mubr.bf16.gmra.mxu0 %v314
    %v353 = vpop.f32.mrf.mxu0
    %v354 = vadd.f32 %v257, %v353
    %v355 = vpop.f32.mrf.mxu0
    %v356 = vpop.f32.mrf.mxu0
    %v357 = vadd.f32 %v258, %v356
    %v358 = vpop.f32.mrf.mxu0
    %359 = vdwg.mxu0
    %361 = vrot.lane.b32.xlu0 %v251, 96
    %v362 = vpop.permute.xlu0 %361
    %v364 = vsel %vm262, %v251, 0
    %v367 = vsel %vm262, %v362, 0
    %369 = vmatprep.subr.bf16.mxu0 0
    %370 = vmatpush1.bf16.xpose.msra.mxu0 0
    %371 = vmatprep.subr.bf16.mxu0 0
    %372 = vmatpush1.bf16.xpose.msra.mxu0 0
    %373 = vmatprep.subr.bf16.mxu0 0
    %374 = vmatpush1.bf16.xpose.msra.mxu0 0
    %375 = vmatprep.subr.bf16.mxu0 0
    %376 = vmatpush1.bf16.xpose.msra.mxu0 0
    %377 = vmatprep.subr.bf16.mxu0 0
    %378 = vmatpush1.bf16.xpose.msra.mxu0 0
    %379 = vmatprep.subr.bf16.mxu0 0
    %380 = vmatpush1.bf16.xpose.msra.mxu0 0
    %381 = vmatprep.subr.bf16.mxu0 0
    %382 = vmatpush1.bf16.xpose.msra.mxu0 0
    %383 = vmatprep.subr.bf16.mxu0 0
    %384 = vmatpush1.bf16.xpose.msra.mxu0 %v367
    %385 = vmatprep.subr.bf16.mxu0 0
    %386 = vmatpush2.bf16.xpose.msra.mxu0 0
    %387 = vmatprep.subr.bf16.mxu0 0
    %388 = vmatpush2.bf16.xpose.msra.mxu0 0
    %389 = vmatprep.subr.bf16.mxu0 0
    %390 = vmatpush2.bf16.xpose.msra.mxu0 0
    %391 = vmatprep.subr.bf16.mxu0 0
    %392 = vmatpush2.bf16.xpose.msra.mxu0 0
    %393 = vmatprep.subr.bf16.mxu0 0
    %394 = vmatpush2.bf16.xpose.msra.mxu0 0
    %395 = vmatprep.subr.bf16.mxu0 0
    %396 = vmatpush2.bf16.xpose.msra.mxu0 0
    %397 = vmatprep.subr.bf16.mxu0 0
    %398 = vmatpush2.bf16.xpose.msra.mxu0 0
    %399 = vmatprep.subr.bf16.mxu0 0
    %400 = vmatpush2.bf16.xpose.msra.mxu0 0
    %401 = vmatprep.mubr.bf16.mxu0 0
    %402 = vmatmul.mubr.bf16.gmra.mxu0 %v364
    %v403 = vpop.f32.mrf.mxu0
    %v404 = vadd.f32 %v257, %v403
    %v405 = vpop.f32.mrf.mxu0
    %v406 = vpop.f32.mrf.mxu0
    %v407 = vadd.f32 %v258, %v406
    %v408 = vpop.f32.mrf.mxu0
    %409 = vdwg.mxu0
    %411 = vrot.lane.b32.xlu0 %v252, 96
    %v412 = vpop.permute.xlu0 %411
    %v414 = vsel %vm262, %v252, 0
    %v417 = vsel %vm262, %v412, 0
    %419 = vmatprep.subr.bf16.mxu0 0
    %420 = vmatpush1.bf16.xpose.msra.mxu0 0
    %421 = vmatprep.subr.bf16.mxu0 0
    %422 = vmatpush1.bf16.xpose.msra.mxu0 0
    %423 = vmatprep.subr.bf16.mxu0 0
    %424 = vmatpush1.bf16.xpose.msra.mxu0 0
    %425 = vmatprep.subr.bf16.mxu0 0
    %426 = vmatpush1.bf16.xpose.msra.mxu0 0
    %427 = vmatprep.subr.bf16.mxu0 0
    %428 = vmatpush1.bf16.xpose.msra.mxu0 0
    %429 = vmatprep.subr.bf16.mxu0 0
    %430 = vmatpush1.bf16.xpose.msra.mxu0 0
    %431 = vmatprep.subr.bf16.mxu0 0
    %432 = vmatpush1.bf16.xpose.msra.mxu0 0
    %433 = vmatprep.subr.bf16.mxu0 0
    %434 = vmatpush1.bf16.xpose.msra.mxu0 %v417
    %435 = vmatprep.subr.bf16.mxu0 0
    %436 = vmatpush2.bf16.xpose.msra.mxu0 0
    %437 = vmatprep.subr.bf16.mxu0 0
    %438 = vmatpush2.bf16.xpose.msra.mxu0 0
    %439 = vmatprep.subr.bf16.mxu0 0
    %440 = vmatpush2.bf16.xpose.msra.mxu0 0
    %441 = vmatprep.subr.bf16.mxu0 0
    %442 = vmatpush2.bf16.xpose.msra.mxu0 0
    %443 = vmatprep.subr.bf16.mxu0 0
    %444 = vmatpush2.bf16.xpose.msra.mxu0 0
    %445 = vmatprep.subr.bf16.mxu0 0
    %446 = vmatpush2.bf16.xpose.msra.mxu0 0
    %447 = vmatprep.subr.bf16.mxu0 0
    %448 = vmatpush2.bf16.xpose.msra.mxu0 0
    %449 = vmatprep.subr.bf16.mxu0 0
    %450 = vmatpush2.bf16.xpose.msra.mxu0 0
    %451 = vmatprep.mubr.bf16.mxu0 0
    %452 = vmatmul.mubr.bf16.gmra.mxu0 %v414
    %v453 = vpop.f32.mrf.mxu0
    %v454 = vadd.f32 %v257, %v453
    %v455 = vpop.f32.mrf.mxu0
    %v456 = vpop.f32.mrf.mxu0
    %v457 = vadd.f32 %v258, %v456
    %v458 = vpop.f32.mrf.mxu0
    %459 = vdwg.mxu0
    %461 = vrot.lane.b32.xlu0 %v253, 96
    %v462 = vpop.permute.xlu0 %461
    %v464 = vsel %vm262, %v253, 0
    %v467 = vsel %vm262, %v462, 0
    %469 = vmatprep.subr.bf16.mxu0 0
    %470 = vmatpush1.bf16.xpose.msra.mxu0 0
    %471 = vmatprep.subr.bf16.mxu0 0
    %472 = vmatpush1.bf16.xpose.msra.mxu0 0
    %473 = vmatprep.subr.bf16.mxu0 0
    %474 = vmatpush1.bf16.xpose.msra.mxu0 0
    %475 = vmatprep.subr.bf16.mxu0 0
    %476 = vmatpush1.bf16.xpose.msra.mxu0 0
    %477 = vmatprep.subr.bf16.mxu0 0
    %478 = vmatpush1.bf16.xpose.msra.mxu0 0
    %479 = vmatprep.subr.bf16.mxu0 0
    %480 = vmatpush1.bf16.xpose.msra.mxu0 0
    %481 = vmatprep.subr.bf16.mxu0 0
    %482 = vmatpush1.bf16.xpose.msra.mxu0 0
    %483 = vmatprep.subr.bf16.mxu0 0
    %484 = vmatpush1.bf16.xpose.msra.mxu0 %v467
    %485 = vmatprep.subr.bf16.mxu0 0
    %486 = vmatpush2.bf16.xpose.msra.mxu0 0
    %487 = vmatprep.subr.bf16.mxu0 0
    %488 = vmatpush2.bf16.xpose.msra.mxu0 0
    %489 = vmatprep.subr.bf16.mxu0 0
    %490 = vmatpush2.bf16.xpose.msra.mxu0 0
    %491 = vmatprep.subr.bf16.mxu0 0
    %492 = vmatpush2.bf16.xpose.msra.mxu0 0
    %493 = vmatprep.subr.bf16.mxu0 0
    %494 = vmatpush2.bf16.xpose.msra.mxu0 0
    %495 = vmatprep.subr.bf16.mxu0 0
    %496 = vmatpush2.bf16.xpose.msra.mxu0 0
    %497 = vmatprep.subr.bf16.mxu0 0
    %498 = vmatpush2.bf16.xpose.msra.mxu0 0
    %499 = vmatprep.subr.bf16.mxu0 0
    %500 = vmatpush2.bf16.xpose.msra.mxu0 0
    %501 = vmatprep.mubr.bf16.mxu0 0
    %502 = vmatmul.mubr.bf16.gmra.mxu0 %v464
    %v503 = vpop.f32.mrf.mxu0
    %v504 = vadd.f32 %v257, %v503
    %v505 = vpop.f32.mrf.mxu0
    %v506 = vpop.f32.mrf.mxu0
    %v507 = vadd.f32 %v258, %v506
    %v508 = vpop.f32.mrf.mxu0
    %509 = vdwg.mxu0
    %511 = vrot.lane.b32.xlu0 %v254, 96
    %v512 = vpop.permute.xlu0 %511
    %v514 = vsel %vm262, %v254, 0
    %v517 = vsel %vm262, %v512, 0
    %519 = vmatprep.subr.bf16.mxu0 0
    %520 = vmatpush1.bf16.xpose.msra.mxu0 0
    %521 = vmatprep.subr.bf16.mxu0 0
    %522 = vmatpush1.bf16.xpose.msra.mxu0 0
    %523 = vmatprep.subr.bf16.mxu0 0
    %524 = vmatpush1.bf16.xpose.msra.mxu0 0
    %525 = vmatprep.subr.bf16.mxu0 0
    %526 = vmatpush1.bf16.xpose.msra.mxu0 0
    %527 = vmatprep.subr.bf16.mxu0 0
    %528 = vmatpush1.bf16.xpose.msra.mxu0 0
    %529 = vmatprep.subr.bf16.mxu0 0
    %530 = vmatpush1.bf16.xpose.msra.mxu0 0
    %531 = vmatprep.subr.bf16.mxu0 0
    %532 = vmatpush1.bf16.xpose.msra.mxu0 0
    %533 = vmatprep.subr.bf16.mxu0 0
    %534 = vmatpush1.bf16.xpose.msra.mxu0 %v517
    %535 = vmatprep.subr.bf16.mxu0 0
    %536 = vmatpush2.bf16.xpose.msra.mxu0 0
    %537 = vmatprep.subr.bf16.mxu0 0
    %538 = vmatpush2.bf16.xpose.msra.mxu0 0
    %539 = vmatprep.subr.bf16.mxu0 0
    %540 = vmatpush2.bf16.xpose.msra.mxu0 0
    %541 = vmatprep.subr.bf16.mxu0 0
    %542 = vmatpush2.bf16.xpose.msra.mxu0 0
    %543 = vmatprep.subr.bf16.mxu0 0
    %544 = vmatpush2.bf16.xpose.msra.mxu0 0
    %545 = vmatprep.subr.bf16.mxu0 0
    %546 = vmatpush2.bf16.xpose.msra.mxu0 0
    %547 = vmatprep.subr.bf16.mxu0 0
    %548 = vmatpush2.bf16.xpose.msra.mxu0 0
    %549 = vmatprep.subr.bf16.mxu0 0
    %550 = vmatpush2.bf16.xpose.msra.mxu0 0
    %551 = vmatprep.mubr.bf16.mxu0 0
    %552 = vmatmul.mubr.bf16.gmra.mxu0 %v514
    %v553 = vpop.f32.mrf.mxu0
    %v554 = vadd.f32 %v257, %v553
    %v555 = vpop.f32.mrf.mxu0
    %v556 = vpop.f32.mrf.mxu0
    %v557 = vadd.f32 %v258, %v556
    %v558 = vpop.f32.mrf.mxu0
    %559 = vdwg.mxu0
    %561 = vrot.lane.b32.xlu0 %v255, 96
    %v562 = vpop.permute.xlu0 %561
    %v564 = vsel %vm262, %v255, 0
    %v567 = vsel %vm262, %v562, 0
    %569 = vmatprep.subr.bf16.mxu0 0
    %570 = vmatpush1.bf16.xpose.msra.mxu0 0
    %571 = vmatprep.subr.bf16.mxu0 0
    %572 = vmatpush1.bf16.xpose.msra.mxu0 0
    %573 = vmatprep.subr.bf16.mxu0 0
    %574 = vmatpush1.bf16.xpose.msra.mxu0 0
    %575 = vmatprep.subr.bf16.mxu0 0
    %576 = vmatpush1.bf16.xpose.msra.mxu0 0
    %577 = vmatprep.subr.bf16.mxu0 0
    %578 = vmatpush1.bf16.xpose.msra.mxu0 0
    %579 = vmatprep.subr.bf16.mxu0 0
    %580 = vmatpush1.bf16.xpose.msra.mxu0 0
    %581 = vmatprep.subr.bf16.mxu0 0
    %582 = vmatpush1.bf16.xpose.msra.mxu0 0
    %583 = vmatprep.subr.bf16.mxu0 0
    %584 = vmatpush1.bf16.xpose.msra.mxu0 %v567
    %585 = vmatprep.subr.bf16.mxu0 0
    %586 = vmatpush2.bf16.xpose.msra.mxu0 0
    %587 = vmatprep.subr.bf16.mxu0 0
    %588 = vmatpush2.bf16.xpose.msra.mxu0 0
    %589 = vmatprep.subr.bf16.mxu0 0
    %590 = vmatpush2.bf16.xpose.msra.mxu0 0
    %591 = vmatprep.subr.bf16.mxu0 0
    %592 = vmatpush2.bf16.xpose.msra.mxu0 0
    %593 = vmatprep.subr.bf16.mxu0 0
    %594 = vmatpush2.bf16.xpose.msra.mxu0 0
    %595 = vmatprep.subr.bf16.mxu0 0
    %596 = vmatpush2.bf16.xpose.msra.mxu0 0
    %597 = vmatprep.subr.bf16.mxu0 0
    %598 = vmatpush2.bf16.xpose.msra.mxu0 0
    %599 = vmatprep.subr.bf16.mxu0 0
    %600 = vmatpush2.bf16.xpose.msra.mxu0 0
    %601 = vmatprep.mubr.bf16.mxu0 0
    %602 = vmatmul.mubr.bf16.gmra.mxu0 %v564
    %v603 = vpop.f32.mrf.mxu0
    %v604 = vadd.f32 %v257, %v603
    %v605 = vpop.f32.mrf.mxu0
    %v606 = vpop.f32.mrf.mxu0
    %v607 = vadd.f32 %v258, %v606
    %v608 = vpop.f32.mrf.mxu0
    %609 = vdwg.mxu0
    %611 = vrot.lane.b32.xlu0 %v256, 96
    %v612 = vpop.permute.xlu0 %611
    %v614 = vsel %vm262, %v256, 0
    %v617 = vsel %vm262, %v612, 0
    %619 = vmatprep.subr.bf16.mxu0 0
    %620 = vmatpush1.bf16.xpose.msra.mxu0 0
    %621 = vmatprep.subr.bf16.mxu0 0
    %622 = vmatpush1.bf16.xpose.msra.mxu0 0
    %623 = vmatprep.subr.bf16.mxu0 0
    %624 = vmatpush1.bf16.xpose.msra.mxu0 0
    %625 = vmatprep.subr.bf16.mxu0 0
    %626 = vmatpush1.bf16.xpose.msra.mxu0 0
    %627 = vmatprep.subr.bf16.mxu0 0
    %628 = vmatpush1.bf16.xpose.msra.mxu0 0
    %629 = vmatprep.subr.bf16.mxu0 0
    %630 = vmatpush1.bf16.xpose.msra.mxu0 0
    %631 = vmatprep.subr.bf16.mxu0 0
    %632 = vmatpush1.bf16.xpose.msra.mxu0 0
    %633 = vmatprep.subr.bf16.mxu0 0
    %634 = vmatpush1.bf16.xpose.msra.mxu0 %v617
    %635 = vmatprep.subr.bf16.mxu0 0
    %636 = vmatpush2.bf16.xpose.msra.mxu0 0
    %637 = vmatprep.subr.bf16.mxu0 0
    %638 = vmatpush2.bf16.xpose.msra.mxu0 0
    %639 = vmatprep.subr.bf16.mxu0 0
    %640 = vmatpush2.bf16.xpose.msra.mxu0 0
    %641 = vmatprep.subr.bf16.mxu0 0
    %642 = vmatpush2.bf16.xpose.msra.mxu0 0
    %643 = vmatprep.subr.bf16.mxu0 0
    %644 = vmatpush2.bf16.xpose.msra.mxu0 0
    %645 = vmatprep.subr.bf16.mxu0 0
    %646 = vmatpush2.bf16.xpose.msra.mxu0 0
    %647 = vmatprep.subr.bf16.mxu0 0
    %648 = vmatpush2.bf16.xpose.msra.mxu0 0
    %649 = vmatprep.subr.bf16.mxu0 0
    %650 = vmatpush2.bf16.xpose.msra.mxu0 0
    %651 = vmatprep.mubr.bf16.mxu0 0
    %652 = vmatmul.mubr.bf16.gmra.mxu0 %v614
    %v653 = vpop.f32.mrf.mxu0
    %v654 = vadd.f32 %v257, %v653
    %v655 = vpop.f32.mrf.mxu0
    %v656 = vpop.f32.mrf.mxu0
    %v657 = vadd.f32 %v258, %v656
    %v658 = vpop.f32.mrf.mxu0
    %659 = vdwg.mxu0
    %v660 = vsel %vm262, %v304, -inf
    %661 = vmax.xlane.f32.xlu0 %v660
    %v662 = vpop.xlane.xlu0 %661
    %v663 = vsel %vm262, %v307, -inf
    %664 = vmax.xlane.f32.xlu0 %v663
    %v665 = vpop.xlane.xlu0 %664
    %v666 = vsel %vm262, %v354, -inf
    %667 = vmax.xlane.f32.xlu0 %v666
    %v668 = vpop.xlane.xlu0 %667
    %v669 = vsel %vm262, %v357, -inf
    %670 = vmax.xlane.f32.xlu0 %v669
    %v671 = vpop.xlane.xlu0 %670
    %v672 = vsel %vm262, %v404, -inf
    %673 = vmax.xlane.f32.xlu0 %v672
    %v674 = vpop.xlane.xlu0 %673
    %v675 = vsel %vm262, %v407, -inf
    %676 = vmax.xlane.f32.xlu0 %v675
    %v677 = vpop.xlane.xlu0 %676
    %v678 = vsel %vm262, %v454, -inf
    %679 = vmax.xlane.f32.xlu0 %v678
    %v680 = vpop.xlane.xlu0 %679
    %v681 = vsel %vm262, %v457, -inf
    %682 = vmax.xlane.f32.xlu0 %v681
    %v683 = vpop.xlane.xlu0 %682
    %v684 = vsel %vm262, %v504, -inf
    %685 = vmax.xlane.f32.xlu0 %v684
    %v686 = vpop.xlane.xlu0 %685
    %v687 = vsel %vm262, %v507, -inf
    %688 = vmax.xlane.f32.xlu0 %v687
    %v689 = vpop.xlane.xlu0 %688
    %v690 = vsel %vm262, %v554, -inf
    %691 = vmax.xlane.f32.xlu0 %v690
    %v692 = vpop.xlane.xlu0 %691
    %v693 = vsel %vm262, %v557, -inf
    %694 = vmax.xlane.f32.xlu0 %v693
    %v695 = vpop.xlane.xlu0 %694
    %v696 = vsel %vm262, %v604, -inf
    %697 = vmax.xlane.f32.xlu0 %v696
    %v698 = vpop.xlane.xlu0 %697
    %v699 = vsel %vm262, %v607, -inf
    %700 = vmax.xlane.f32.xlu0 %v699
    %v701 = vpop.xlane.xlu0 %700
    %v702 = vsel %vm262, %v654, -inf
    %703 = vmax.xlane.f32.xlu0 %v702
    %v704 = vpop.xlane.xlu0 %703
    %v705 = vsel %vm262, %v657, -inf
    %706 = vmax.xlane.f32.xlu0 %v705
    %v707 = vpop.xlane.xlu0 %706
    %v708 = vsub.f32 %v304, %v662
    %v709 = vsub.f32 %v307, %v665
    %v710 = vsub.f32 %v354, %v668
    %v711 = vsub.f32 %v357, %v671
    %v712 = vsub.f32 %v404, %v674
    %v713 = vsub.f32 %v407, %v677
    %v714 = vsub.f32 %v454, %v680
    %v715 = vsub.f32 %v457, %v683
    %v716 = vsub.f32 %v504, %v686
    %v717 = vsub.f32 %v507, %v689
    %v718 = vsub.f32 %v554, %v692
    %v719 = vsub.f32 %v557, %v695
    %v720 = vsub.f32 %v604, %v698
    %v721 = vsub.f32 %v607, %v701
    %v722 = vsub.f32 %v654, %v704
    %v723 = vsub.f32 %v657, %v707
    %v724 = vmul.f32 %v708, 1.442695
    %v725 = vpow.pop %v724
    %v726 = vmul.f32 %v709, 1.442695
    %v727 = vpow.pop %v726
    %v728 = vmul.f32 %v710, 1.442695
    %v729 = vpow.pop %v728
    %v730 = vmul.f32 %v711, 1.442695
    %v731 = vpow.pop %v730
    %v732 = vmul.f32 %v712, 1.442695
    %v733 = vpow.pop %v732
    %v734 = vmul.f32 %v713, 1.442695
    %v735 = vpow.pop %v734
    %v736 = vmul.f32 %v714, 1.442695
    %v737 = vpow.pop %v736
    %v738 = vmul.f32 %v715, 1.442695
    %v739 = vpow.pop %v738
    %v740 = vmul.f32 %v716, 1.442695
    %v741 = vpow.pop %v740
    %v742 = vmul.f32 %v717, 1.442695
    %v743 = vpow.pop %v742
    %v744 = vmul.f32 %v718, 1.442695
    %v745 = vpow.pop %v744
    %v746 = vmul.f32 %v719, 1.442695
    %v747 = vpow.pop %v746
    %v748 = vmul.f32 %v720, 1.442695
    %v749 = vpow.pop %v748
    %v750 = vmul.f32 %v721, 1.442695
    %v751 = vpow.pop %v750
    %v752 = vmul.f32 %v722, 1.442695
    %v753 = vpow.pop %v752
    %v754 = vmul.f32 %v723, 1.442695
    %v755 = vpow.pop %v754
    %v756 = vsel %vm262, %v725, 0.0
    %757 = vadd.xlane.f32.xlu0 %v756
    %v758 = vpop.xlane.xlu0 %757
    %v759 = vsel %vm262, %v727, 0.0
    %760 = vadd.xlane.f32.xlu0 %v759
    %v761 = vpop.xlane.xlu0 %760
    %v762 = vsel %vm262, %v729, 0.0
    %763 = vadd.xlane.f32.xlu0 %v762
    %v764 = vpop.xlane.xlu0 %763
    %v765 = vsel %vm262, %v731, 0.0
    %766 = vadd.xlane.f32.xlu0 %v765
    %v767 = vpop.xlane.xlu0 %766
    %v768 = vsel %vm262, %v733, 0.0
    %769 = vadd.xlane.f32.xlu0 %v768
    %v770 = vpop.xlane.xlu0 %769
    %v771 = vsel %vm262, %v735, 0.0
    %772 = vadd.xlane.f32.xlu0 %v771
    %v773 = vpop.xlane.xlu0 %772
    %v774 = vsel %vm262, %v737, 0.0
    %775 = vadd.xlane.f32.xlu0 %v774
    %v776 = vpop.xlane.xlu0 %775
    %v777 = vsel %vm262, %v739, 0.0
    %778 = vadd.xlane.f32.xlu0 %v777
    %v779 = vpop.xlane.xlu0 %778
    %v780 = vsel %vm262, %v741, 0.0
    %781 = vadd.xlane.f32.xlu0 %v780
    %v782 = vpop.xlane.xlu0 %781
    %v783 = vsel %vm262, %v743, 0.0
    %784 = vadd.xlane.f32.xlu0 %v783
    %v785 = vpop.xlane.xlu0 %784
    %v786 = vsel %vm262, %v745, 0.0
    %787 = vadd.xlane.f32.xlu0 %v786
    %v788 = vpop.xlane.xlu0 %787
    %v789 = vsel %vm262, %v747, 0.0
    %790 = vadd.xlane.f32.xlu0 %v789
    %v791 = vpop.xlane.xlu0 %790
    %v792 = vsel %vm262, %v749, 0.0
    %793 = vadd.xlane.f32.xlu0 %v792
    %v794 = vpop.xlane.xlu0 %793
    %v795 = vsel %vm262, %v751, 0.0
    %796 = vadd.xlane.f32.xlu0 %v795
    %v797 = vpop.xlane.xlu0 %796
    %v798 = vsel %vm262, %v753, 0.0
    %799 = vadd.xlane.f32.xlu0 %v798
    %v800 = vpop.xlane.xlu0 %799
    %v801 = vsel %vm262, %v755, 0.0
    %802 = vadd.xlane.f32.xlu0 %v801
    %v803 = vpop.xlane.xlu0 %802
    %v804 = vrcp.pop %v758
    %v805 = vrcp.pop %v761
    %v806 = vrcp.pop %v764
    %v807 = vrcp.pop %v767
    %v808 = vrcp.pop %v770
    %v809 = vrcp.pop %v773
    %v810 = vrcp.pop %v776
    %v811 = vrcp.pop %v779
    %v812 = vrcp.pop %v782
    %v813 = vrcp.pop %v785
    %v814 = vrcp.pop %v788
    %v815 = vrcp.pop %v791
    %v816 = vrcp.pop %v794
    %v817 = vrcp.pop %v797
    %v818 = vrcp.pop %v800
    %v819 = vrcp.pop %v803
    %v820 = vmul.f32 %v725, %v804
    %v821 = vmul.f32 %v727, %v805
    %v822 = vmul.f32 %v729, %v806
    %v823 = vmul.f32 %v731, %v807
    %v824 = vmul.f32 %v733, %v808
    %v825 = vmul.f32 %v735, %v809
    %v826 = vmul.f32 %v737, %v810
    %v827 = vmul.f32 %v739, %v811
    %v828 = vmul.f32 %v741, %v812
    %v829 = vmul.f32 %v743, %v813
    %v830 = vmul.f32 %v745, %v814
    %v831 = vmul.f32 %v747, %v815
    %v832 = vmul.f32 %v749, %v816
    %v833 = vmul.f32 %v751, %v817
    %v834 = vmul.f32 %v753, %v818
    %v835 = vmul.f32 %v755, %v819
    %v836 = vpack.c.bf16 %v821, %v820
    %v837 = vpack.c.bf16 %v823, %v822
    %v838 = vpack.c.bf16 %v825, %v824
    %v839 = vpack.c.bf16 %v827, %v826
    %v840 = vpack.c.bf16 %v829, %v828
    %v841 = vpack.c.bf16 %v831, %v830
    %v842 = vpack.c.bf16 %v833, %v832
    %v843 = vpack.c.bf16 %v835, %v834
    %844 = vrot.lane.b32.xlu0 %v249, 64
    %v845 = vpop.permute.xlu0 %844
    %v848 = vsel %vm262, %v836, 0
    %850 = vmatprep.subr.bf16.mxu0 0
    %851 = vmatpush1.bf16.msra.mxu0 0
    %852 = vmatprep.subr.bf16.mxu0 0
    %853 = vmatpush1.bf16.msra.mxu0 0
    %854 = vmatprep.subr.bf16.mxu0 0
    %855 = vmatpush1.bf16.msra.mxu0 0
    %856 = vmatprep.subr.bf16.mxu0 0
    %857 = vmatpush1.bf16.msra.mxu0 0
    %858 = vmatprep.subr.bf16.mxu0 0
    %859 = vmatpush1.bf16.msra.mxu0 0
    %860 = vmatprep.subr.bf16.mxu0 0
    %861 = vmatpush1.bf16.msra.mxu0 0
    %862 = vmatprep.subr.bf16.mxu0 0
    %863 = vmatpush1.bf16.msra.mxu0 0
    %864 = vmatprep.subr.bf16.mxu0 0
    %865 = vmatpush1.bf16.msra.mxu0 %v845
    %866 = vmatprep.subr.bf16.mxu0 0
    %867 = vmatpush2.bf16.msra.mxu0 0
    %868 = vmatprep.subr.bf16.mxu0 0
    %869 = vmatpush2.bf16.msra.mxu0 0
    %870 = vmatprep.subr.bf16.mxu0 0
    %871 = vmatpush2.bf16.msra.mxu0 0
    %872 = vmatprep.subr.bf16.mxu0 0
    %873 = vmatpush2.bf16.msra.mxu0 0
    %874 = vmatprep.subr.bf16.mxu0 0
    %875 = vmatpush2.bf16.msra.mxu0 0
    %876 = vmatprep.subr.bf16.mxu0 0
    %877 = vmatpush2.bf16.msra.mxu0 0
    %878 = vmatprep.subr.bf16.mxu0 0
    %879 = vmatpush2.bf16.msra.mxu0 0
    %880 = vmatprep.subr.bf16.mxu0 0
    %881 = vmatpush2.bf16.msra.mxu0 0
    %882 = vmatprep.mubr.bf16.mxu0 0
    %883 = vmatmul.mubr.bf16.gmra.mxu0 %v848
    %v884 = vpop.f32.mrf.mxu0
    %v885 = vadd.f32 0.0, %v884
    %v886 = vpop.f32.mrf.mxu0
    %v887 = vpop.f32.mrf.mxu0
    %v888 = vadd.f32 0.0, %v887
    %v889 = vpop.f32.mrf.mxu0
    %890 = vdwg.mxu0
    %891 = vrot.lane.b32.xlu0 %v250, 64
    %v892 = vpop.permute.xlu0 %891
    %v895 = vsel %vm262, %v837, 0
    %897 = vmatprep.subr.bf16.mxu0 0
    %898 = vmatpush1.bf16.msra.mxu0 0
    %899 = vmatprep.subr.bf16.mxu0 0
    %900 = vmatpush1.bf16.msra.mxu0 0
    %901 = vmatprep.subr.bf16.mxu0 0
    %902 = vmatpush1.bf16.msra.mxu0 0
    %903 = vmatprep.subr.bf16.mxu0 0
    %904 = vmatpush1.bf16.msra.mxu0 0
    %905 = vmatprep.subr.bf16.mxu0 0
    %906 = vmatpush1.bf16.msra.mxu0 0
    %907 = vmatprep.subr.bf16.mxu0 0
    %908 = vmatpush1.bf16.msra.mxu0 0
    %909 = vmatprep.subr.bf16.mxu0 0
    %910 = vmatpush1.bf16.msra.mxu0 0
    %911 = vmatprep.subr.bf16.mxu0 0
    %912 = vmatpush1.bf16.msra.mxu0 %v892
    %913 = vmatprep.subr.bf16.mxu0 0
    %914 = vmatpush2.bf16.msra.mxu0 0
    %915 = vmatprep.subr.bf16.mxu0 0
    %916 = vmatpush2.bf16.msra.mxu0 0
    %917 = vmatprep.subr.bf16.mxu0 0
    %918 = vmatpush2.bf16.msra.mxu0 0
    %919 = vmatprep.subr.bf16.mxu0 0
    %920 = vmatpush2.bf16.msra.mxu0 0
    %921 = vmatprep.subr.bf16.mxu0 0
    %922 = vmatpush2.bf16.msra.mxu0 0
    %923 = vmatprep.subr.bf16.mxu0 0
    %924 = vmatpush2.bf16.msra.mxu0 0
    %925 = vmatprep.subr.bf16.mxu0 0
    %926 = vmatpush2.bf16.msra.mxu0 0
    %927 = vmatprep.subr.bf16.mxu0 0
    %928 = vmatpush2.bf16.msra.mxu0 0
    %929 = vmatprep.mubr.bf16.mxu0 0
    %930 = vmatmul.mubr.bf16.gmra.mxu0 %v895
    %v931 = vpop.f32.mrf.mxu0
    %v932 = vadd.f32 0.0, %v931
    %v933 = vpop.f32.mrf.mxu0
    %v934 = vpop.f32.mrf.mxu0
    %v935 = vadd.f32 0.0, %v934
    %v936 = vpop.f32.mrf.mxu0
    %937 = vdwg.mxu0
    %938 = vrot.lane.b32.xlu0 %v251, 64
    %v939 = vpop.permute.xlu0 %938
    %v942 = vsel %vm262, %v838, 0
    %944 = vmatprep.subr.bf16.mxu0 0
    %945 = vmatpush1.bf16.msra.mxu0 0
    %946 = vmatprep.subr.bf16.mxu0 0
    %947 = vmatpush1.bf16.msra.mxu0 0
    %948 = vmatprep.subr.bf16.mxu0 0
    %949 = vmatpush1.bf16.msra.mxu0 0
    %950 = vmatprep.subr.bf16.mxu0 0
    %951 = vmatpush1.bf16.msra.mxu0 0
    %952 = vmatprep.subr.bf16.mxu0 0
    %953 = vmatpush1.bf16.msra.mxu0 0
    %954 = vmatprep.subr.bf16.mxu0 0
    %955 = vmatpush1.bf16.msra.mxu0 0
    %956 = vmatprep.subr.bf16.mxu0 0
    %957 = vmatpush1.bf16.msra.mxu0 0
    %958 = vmatprep.subr.bf16.mxu0 0
    %959 = vmatpush1.bf16.msra.mxu0 %v939
    %960 = vmatprep.subr.bf16.mxu0 0
    %961 = vmatpush2.bf16.msra.mxu0 0
    %962 = vmatprep.subr.bf16.mxu0 0
    %963 = vmatpush2.bf16.msra.mxu0 0
    %964 = vmatprep.subr.bf16.mxu0 0
    %965 = vmatpush2.bf16.msra.mxu0 0
    %966 = vmatprep.subr.bf16.mxu0 0
    %967 = vmatpush2.bf16.msra.mxu0 0
    %968 = vmatprep.subr.bf16.mxu0 0
    %969 = vmatpush2.bf16.msra.mxu0 0
    %970 = vmatprep.subr.bf16.mxu0 0
    %971 = vmatpush2.bf16.msra.mxu0 0
    %972 = vmatprep.subr.bf16.mxu0 0
    %973 = vmatpush2.bf16.msra.mxu0 0
    %974 = vmatprep.subr.bf16.mxu0 0
    %975 = vmatpush2.bf16.msra.mxu0 0
    %976 = vmatprep.mubr.bf16.mxu0 0
    %977 = vmatmul.mubr.bf16.gmra.mxu0 %v942
    %v978 = vpop.f32.mrf.mxu0
    %v979 = vadd.f32 0.0, %v978
    %v980 = vpop.f32.mrf.mxu0
    %v981 = vpop.f32.mrf.mxu0
    %v982 = vadd.f32 0.0, %v981
    %v983 = vpop.f32.mrf.mxu0
    %984 = vdwg.mxu0
    %985 = vrot.lane.b32.xlu0 %v252, 64
    %v986 = vpop.permute.xlu0 %985
    %v989 = vsel %vm262, %v839, 0
    %991 = vmatprep.subr.bf16.mxu0 0
    %992 = vmatpush1.bf16.msra.mxu0 0
    %993 = vmatprep.subr.bf16.mxu0 0
    %994 = vmatpush1.bf16.msra.mxu0 0
    %995 = vmatprep.subr.bf16.mxu0 0
    %996 = vmatpush1.bf16.msra.mxu0 0
    %997 = vmatprep.subr.bf16.mxu0 0
    %998 = vmatpush1.bf16.msra.mxu0 0
    %999 = vmatprep.subr.bf16.mxu0 0
    %1000 = vmatpush1.bf16.msra.mxu0 0
    %1001 = vmatprep.subr.bf16.mxu0 0
    %1002 = vmatpush1.bf16.msra.mxu0 0
    %1003 = vmatprep.subr.bf16.mxu0 0
    %1004 = vmatpush1.bf16.msra.mxu0 0
    %1005 = vmatprep.subr.bf16.mxu0 0
    %1006 = vmatpush1.bf16.msra.mxu0 %v986
    %1007 = vmatprep.subr.bf16.mxu0 0
    %1008 = vmatpush2.bf16.msra.mxu0 0
    %1009 = vmatprep.subr.bf16.mxu0 0
    %1010 = vmatpush2.bf16.msra.mxu0 0
    %1011 = vmatprep.subr.bf16.mxu0 0
    %1012 = vmatpush2.bf16.msra.mxu0 0
    %1013 = vmatprep.subr.bf16.mxu0 0
    %1014 = vmatpush2.bf16.msra.mxu0 0
    %1015 = vmatprep.subr.bf16.mxu0 0
    %1016 = vmatpush2.bf16.msra.mxu0 0
    %1017 = vmatprep.subr.bf16.mxu0 0
    %1018 = vmatpush2.bf16.msra.mxu0 0
    %1019 = vmatprep.subr.bf16.mxu0 0
    %1020 = vmatpush2.bf16.msra.mxu0 0
    %1021 = vmatprep.subr.bf16.mxu0 0
    %1022 = vmatpush2.bf16.msra.mxu0 0
    %1023 = vmatprep.mubr.bf16.mxu0 0
    %1024 = vmatmul.mubr.bf16.gmra.mxu0 %v989
    %v1025 = vpop.f32.mrf.mxu0
    %v1026 = vadd.f32 0.0, %v1025
    %v1027 = vpop.f32.mrf.mxu0
    %v1028 = vpop.f32.mrf.mxu0
    %v1029 = vadd.f32 0.0, %v1028
    %v1030 = vpop.f32.mrf.mxu0
    %1031 = vdwg.mxu0
    %1032 = vrot.lane.b32.xlu0 %v253, 64
    %v1033 = vpop.permute.xlu0 %1032
    %v1036 = vsel %vm262, %v840, 0
    %1038 = vmatprep.subr.bf16.mxu0 0
    %1039 = vmatpush1.bf16.msra.mxu0 0
    %1040 = vmatprep.subr.bf16.mxu0 0
    %1041 = vmatpush1.bf16.msra.mxu0 0
    %1042 = vmatprep.subr.bf16.mxu0 0
    %1043 = vmatpush1.bf16.msra.mxu0 0
    %1044 = vmatprep.subr.bf16.mxu0 0
    %1045 = vmatpush1.bf16.msra.mxu0 0
    %1046 = vmatprep.subr.bf16.mxu0 0
    %1047 = vmatpush1.bf16.msra.mxu0 0
    %1048 = vmatprep.subr.bf16.mxu0 0
    %1049 = vmatpush1.bf16.msra.mxu0 0
    %1050 = vmatprep.subr.bf16.mxu0 0
    %1051 = vmatpush1.bf16.msra.mxu0 0
    %1052 = vmatprep.subr.bf16.mxu0 0
    %1053 = vmatpush1.bf16.msra.mxu0 %v1033
    %1054 = vmatprep.subr.bf16.mxu0 0
    %1055 = vmatpush2.bf16.msra.mxu0 0
    %1056 = vmatprep.subr.bf16.mxu0 0
    %1057 = vmatpush2.bf16.msra.mxu0 0
    %1058 = vmatprep.subr.bf16.mxu0 0
    %1059 = vmatpush2.bf16.msra.mxu0 0
    %1060 = vmatprep.subr.bf16.mxu0 0
    %1061 = vmatpush2.bf16.msra.mxu0 0
    %1062 = vmatprep.subr.bf16.mxu0 0
    %1063 = vmatpush2.bf16.msra.mxu0 0
    %1064 = vmatprep.subr.bf16.mxu0 0
    %1065 = vmatpush2.bf16.msra.mxu0 0
    %1066 = vmatprep.subr.bf16.mxu0 0
    %1067 = vmatpush2.bf16.msra.mxu0 0
    %1068 = vmatprep.subr.bf16.mxu0 0
    %1069 = vmatpush2.bf16.msra.mxu0 0
    %1070 = vmatprep.mubr.bf16.mxu0 0
    %1071 = vmatmul.mubr.bf16.gmra.mxu0 %v1036
    %v1072 = vpop.f32.mrf.mxu0
    %v1073 = vadd.f32 0.0, %v1072
    %v1074 = vpop.f32.mrf.mxu0
    %v1075 = vpop.f32.mrf.mxu0
    %v1076 = vadd.f32 0.0, %v1075
    %v1077 = vpop.f32.mrf.mxu0
    %1078 = vdwg.mxu0
    %1079 = vrot.lane.b32.xlu0 %v254, 64
    %v1080 = vpop.permute.xlu0 %1079
    %v1083 = vsel %vm262, %v841, 0
    %1085 = vmatprep.subr.bf16.mxu0 0
    %1086 = vmatpush1.bf16.msra.mxu0 0
    %1087 = vmatprep.subr.bf16.mxu0 0
    %1088 = vmatpush1.bf16.msra.mxu0 0
    %1089 = vmatprep.subr.bf16.mxu0 0
    %1090 = vmatpush1.bf16.msra.mxu0 0
    %1091 = vmatprep.subr.bf16.mxu0 0
    %1092 = vmatpush1.bf16.msra.mxu0 0
    %1093 = vmatprep.subr.bf16.mxu0 0
    %1094 = vmatpush1.bf16.msra.mxu0 0
    %1095 = vmatprep.subr.bf16.mxu0 0
    %1096 = vmatpush1.bf16.msra.mxu0 0
    %1097 = vmatprep.subr.bf16.mxu0 0
    %1098 = vmatpush1.bf16.msra.mxu0 0
    %1099 = vmatprep.subr.bf16.mxu0 0
    %1100 = vmatpush1.bf16.msra.mxu0 %v1080
    %1101 = vmatprep.subr.bf16.mxu0 0
    %1102 = vmatpush2.bf16.msra.mxu0 0
    %1103 = vmatprep.subr.bf16.mxu0 0
    %1104 = vmatpush2.bf16.msra.mxu0 0
    %1105 = vmatprep.subr.bf16.mxu0 0
    %1106 = vmatpush2.bf16.msra.mxu0 0
    %1107 = vmatprep.subr.bf16.mxu0 0
    %1108 = vmatpush2.bf16.msra.mxu0 0
    %1109 = vmatprep.subr.bf16.mxu0 0
    %1110 = vmatpush2.bf16.msra.mxu0 0
    %1111 = vmatprep.subr.bf16.mxu0 0
    %1112 = vmatpush2.bf16.msra.mxu0 0
    %1113 = vmatprep.subr.bf16.mxu0 0
    %1114 = vmatpush2.bf16.msra.mxu0 0
    %1115 = vmatprep.subr.bf16.mxu0 0
    %1116 = vmatpush2.bf16.msra.mxu0 0
    %1117 = vmatprep.mubr.bf16.mxu0 0
    %1118 = vmatmul.mubr.bf16.gmra.mxu0 %v1083
    %v1119 = vpop.f32.mrf.mxu0
    %v1120 = vadd.f32 0.0, %v1119
    %v1121 = vpop.f32.mrf.mxu0
    %v1122 = vpop.f32.mrf.mxu0
    %v1123 = vadd.f32 0.0, %v1122
    %v1124 = vpop.f32.mrf.mxu0
    %1125 = vdwg.mxu0
    %1126 = vrot.lane.b32.xlu0 %v255, 64
    %v1127 = vpop.permute.xlu0 %1126
    %v1130 = vsel %vm262, %v842, 0
    %1132 = vmatprep.subr.bf16.mxu0 0
    %1133 = vmatpush1.bf16.msra.mxu0 0
    %1134 = vmatprep.subr.bf16.mxu0 0
    %1135 = vmatpush1.bf16.msra.mxu0 0
    %1136 = vmatprep.subr.bf16.mxu0 0
    %1137 = vmatpush1.bf16.msra.mxu0 0
    %1138 = vmatprep.subr.bf16.mxu0 0
    %1139 = vmatpush1.bf16.msra.mxu0 0
    %1140 = vmatprep.subr.bf16.mxu0 0
    %1141 = vmatpush1.bf16.msra.mxu0 0
    %1142 = vmatprep.subr.bf16.mxu0 0
    %1143 = vmatpush1.bf16.msra.mxu0 0
    %1144 = vmatprep.subr.bf16.mxu0 0
    %1145 = vmatpush1.bf16.msra.mxu0 0
    %1146 = vmatprep.subr.bf16.mxu0 0
    %1147 = vmatpush1.bf16.msra.mxu0 %v1127
    %1148 = vmatprep.subr.bf16.mxu0 0
    %1149 = vmatpush2.bf16.msra.mxu0 0
    %1150 = vmatprep.subr.bf16.mxu0 0
    %1151 = vmatpush2.bf16.msra.mxu0 0
    %1152 = vmatprep.subr.bf16.mxu0 0
    %1153 = vmatpush2.bf16.msra.mxu0 0
    %1154 = vmatprep.subr.bf16.mxu0 0
    %1155 = vmatpush2.bf16.msra.mxu0 0
    %1156 = vmatprep.subr.bf16.mxu0 0
    %1157 = vmatpush2.bf16.msra.mxu0 0
    %1158 = vmatprep.subr.bf16.mxu0 0
    %1159 = vmatpush2.bf16.msra.mxu0 0
    %1160 = vmatprep.subr.bf16.mxu0 0
    %1161 = vmatpush2.bf16.msra.mxu0 0
    %1162 = vmatprep.subr.bf16.mxu0 0
    %1163 = vmatpush2.bf16.msra.mxu0 0
    %1164 = vmatprep.mubr.bf16.mxu0 0
    %1165 = vmatmul.mubr.bf16.gmra.mxu0 %v1130
    %v1166 = vpop.f32.mrf.mxu0
    %v1167 = vadd.f32 0.0, %v1166
    %v1168 = vpop.f32.mrf.mxu0
    %v1169 = vpop.f32.mrf.mxu0
    %v1170 = vadd.f32 0.0, %v1169
    %v1171 = vpop.f32.mrf.mxu0
    %1172 = vdwg.mxu0
    %1173 = vrot.lane.b32.xlu0 %v256, 64
    %v1174 = vpop.permute.xlu0 %1173
    %v1177 = vsel %vm262, %v843, 0
    %1179 = vmatprep.subr.bf16.mxu0 0
    %1180 = vmatpush1.bf16.msra.mxu0 0
    %1181 = vmatprep.subr.bf16.mxu0 0
    %1182 = vmatpush1.bf16.msra.mxu0 0
    %1183 = vmatprep.subr.bf16.mxu0 0
    %1184 = vmatpush1.bf16.msra.mxu0 0
    %1185 = vmatprep.subr.bf16.mxu0 0
    %1186 = vmatpush1.bf16.msra.mxu0 0
    %1187 = vmatprep.subr.bf16.mxu0 0
    %1188 = vmatpush1.bf16.msra.mxu0 0
    %1189 = vmatprep.subr.bf16.mxu0 0
    %1190 = vmatpush1.bf16.msra.mxu0 0
    %1191 = vmatprep.subr.bf16.mxu0 0
    %1192 = vmatpush1.bf16.msra.mxu0 0
    %1193 = vmatprep.subr.bf16.mxu0 0
    %1194 = vmatpush1.bf16.msra.mxu0 %v1174
    %1195 = vmatprep.subr.bf16.mxu0 0
    %1196 = vmatpush2.bf16.msra.mxu0 0
    %1197 = vmatprep.subr.bf16.mxu0 0
    %1198 = vmatpush2.bf16.msra.mxu0 0
    %1199 = vmatprep.subr.bf16.mxu0 0
    %1200 = vmatpush2.bf16.msra.mxu0 0
    %1201 = vmatprep.subr.bf16.mxu0 0
    %1202 = vmatpush2.bf16.msra.mxu0 0
    %1203 = vmatprep.subr.bf16.mxu0 0
    %1204 = vmatpush2.bf16.msra.mxu0 0
    %1205 = vmatprep.subr.bf16.mxu0 0
    %1206 = vmatpush2.bf16.msra.mxu0 0
    %1207 = vmatprep.subr.bf16.mxu0 0
    %1208 = vmatpush2.bf16.msra.mxu0 0
    %1209 = vmatprep.subr.bf16.mxu0 0
    %1210 = vmatpush2.bf16.msra.mxu0 0
    %1211 = vmatprep.mubr.bf16.mxu0 0
    %1212 = vmatmul.mubr.bf16.gmra.mxu0 %v1177
    %v1213 = vpop.f32.mrf.mxu0
    %v1214 = vadd.f32 0.0, %v1213
    %v1215 = vpop.f32.mrf.mxu0
    %v1216 = vpop.f32.mrf.mxu0
    %v1217 = vadd.f32 0.0, %v1216
    %v1218 = vpop.f32.mrf.mxu0
    %1219 = vdwg.mxu0
    %s1220 = scalar_lea.vmem [#allocation7], 16
    %v1221 = vld [vmem:[%s1220] sm:$0xff]
    %v1222 = vld [vmem:[%s1220 + $0x8] sm:$0xff]
    %1223 = vrot.lane.b32.xlu0 %v249, 112
    %v1224 = vpop.permute.xlu0 %1223
    %1225 = vrot.lane.b32.xlu0 %v249, 80
    %v1226 = vpop.permute.xlu0 %1225
    %v1228 = vsel %vm262, %v1224, 0
    %v1231 = vsel %vm262, %v1226, 0
    %1233 = vmatprep.subr.bf16.mxu0 0
    %1234 = vmatpush1.bf16.xpose.msra.mxu0 0
    %1235 = vmatprep.subr.bf16.mxu0 0
    %1236 = vmatpush1.bf16.xpose.msra.mxu0 0
    %1237 = vmatprep.subr.bf16.mxu0 0
    %1238 = vmatpush1.bf16.xpose.msra.mxu0 0
    %1239 = vmatprep.subr.bf16.mxu0 0
    %1240 = vmatpush1.bf16.xpose.msra.mxu0 0
    %1241 = vmatprep.subr.bf16.mxu0 0
    %1242 = vmatpush1.bf16.xpose.msra.mxu0 0
    %1243 = vmatprep.subr.bf16.mxu0 0
    %1244 = vmatpush1.bf16.xpose.msra.mxu0 0
    %1245 = vmatprep.subr.bf16.mxu0 0
    %1246 = vmatpush1.bf16.xpose.msra.mxu0 0
    %1247 = vmatprep.subr.bf16.mxu0 0
    %1248 = vmatpush1.bf16.xpose.msra.mxu0 %v1231
    %1249 = vmatprep.subr.bf16.mxu0 0
    %1250 = vmatpush2.bf16.xpose.msra.mxu0 0
    %1251 = vmatprep.subr.bf16.mxu0 0
    %1252 = vmatpush2.bf16.xpose.msra.mxu0 0
    %1253 = vmatprep.subr.bf16.mxu0 0
    %1254 = vmatpush2.bf16.xpose.msra.mxu0 0
    %1255 = vmatprep.subr.bf16.mxu0 0
    %1256 = vmatpush2.bf16.xpose.msra.mxu0 0
    %1257 = vmatprep.subr.bf16.mxu0 0
    %1258 = vmatpush2.bf16.xpose.msra.mxu0 0
    %1259 = vmatprep.subr.bf16.mxu0 0
    %1260 = vmatpush2.bf16.xpose.msra.mxu0 0
    %1261 = vmatprep.subr.bf16.mxu0 0
    %1262 = vmatpush2.bf16.xpose.msra.mxu0 0
    %1263 = vmatprep.subr.bf16.mxu0 0
    %1264 = vmatpush2.bf16.xpose.msra.mxu0 0
    %1265 = vmatprep.mubr.bf16.mxu0 0
    %1266 = vmatmul.mubr.bf16.gmra.mxu0 %v1228
    %v1267 = vpop.f32.mrf.mxu0
    %v1268 = vadd.f32 %v1221, %v1267
    %v1269 = vpop.f32.mrf.mxu0
    %v1270 = vpop.f32.mrf.mxu0
    %v1271 = vadd.f32 %v1222, %v1270
    %v1272 = vpop.f32.mrf.mxu0
    %1273 = vdwg.mxu0
    %1274 = vrot.lane.b32.xlu0 %v250, 112
    %v1275 = vpop.permute.xlu0 %1274
    %1276 = vrot.lane.b32.xlu0 %v250, 80
    %v1277 = vpop.permute.xlu0 %1276
    %v1279 = vsel %vm262, %v1275, 0
    %v1282 = vsel %vm262, %v1277, 0
    %1284 = vmatprep.subr.bf16.mxu0 0
    %1285 = vmatpush1.bf16.xpose.msra.mxu0 0
    %1286 = vmatprep.subr.bf16.mxu0 0
    %1287 = vmatpush1.bf16.xpose.msra.mxu0 0
    %1288 = vmatprep.subr.bf16.mxu0 0
    %1289 = vmatpush1.bf16.xpose.msra.mxu0 0
    %1290 = vmatprep.subr.bf16.mxu0 0
    %1291 = vmatpush1.bf16.xpose.msra.mxu0 0
    %1292 = vmatprep.subr.bf16.mxu0 0
    %1293 = vmatpush1.bf16.xpose.msra.mxu0 0
    %1294 = vmatprep.subr.bf16.mxu0 0
    %1295 = vmatpush1.bf16.xpose.msra.mxu0 0
    %1296 = vmatprep.subr.bf16.mxu0 0
    %1297 = vmatpush1.bf16.xpose.msra.mxu0 0
    %1298 = vmatprep.subr.bf16.mxu0 0
    %1299 = vmatpush1.bf16.xpose.msra.mxu0 %v1282
    %1300 = vmatprep.subr.bf16.mxu0 0
    %1301 = vmatpush2.bf16.xpose.msra.mxu0 0
    %1302 = vmatprep.subr.bf16.mxu0 0
    %1303 = vmatpush2.bf16.xpose.msra.mxu0 0
    %1304 = vmatprep.subr.bf16.mxu0 0
    %1305 = vmatpush2.bf16.xpose.msra.mxu0 0
    %1306 = vmatprep.subr.bf16.mxu0 0
    %1307 = vmatpush2.bf16.xpose.msra.mxu0 0
    %1308 = vmatprep.subr.bf16.mxu0 0
    %1309 = vmatpush2.bf16.xpose.msra.mxu0 0
    %1310 = vmatprep.subr.bf16.mxu0 0
    %1311 = vmatpush2.bf16.xpose.msra.mxu0 0
    %1312 = vmatprep.subr.bf16.mxu0 0
    %1313 = vmatpush2.bf16.xpose.msra.mxu0 0
    %1314 = vmatprep.subr.bf16.mxu0 0
    %1315 = vmatpush2.bf16.xpose.msra.mxu0 0
    %1316 = vmatprep.mubr.bf16.mxu0 0
    %1317 = vmatmul.mubr.bf16.gmra.mxu0 %v1279
    %v1318 = vpop.f32.mrf.mxu0
    %v1319 = vadd.f32 %v1221, %v1318
    %v1320 = vpop.f32.mrf.mxu0
    %v1321 = vpop.f32.mrf.mxu0
    %v1322 = vadd.f32 %v1222, %v1321
    %v1323 = vpop.f32.mrf.mxu0
    %1324 = vdwg.mxu0
    %1325 = vrot.lane.b32.xlu0 %v251, 112
    %v1326 = vpop.permute.xlu0 %1325
    %1327 = vrot.lane.b32.xlu0 %v251, 80
    %v1328 = vpop.permute.xlu0 %1327
    %v1330 = vsel %vm262, %v1326, 0
    %v1333 = vsel %vm262, %v1328, 0
    %1335 = vmatprep.subr.bf16.mxu0 0
    %1336 = vmatpush1.bf16.xpose.msra.mxu0 0
    %1337 = vmatprep.subr.bf16.mxu0 0
    %1338 = vmatpush1.bf16.xpose.msra.mxu0 0
    %1339 = vmatprep.subr.bf16.mxu0 0
    %1340 = vmatpush1.bf16.xpose.msra.mxu0 0
    %1341 = vmatprep.subr.bf16.mxu0 0
    %1342 = vmatpush1.bf16.xpose.msra.mxu0 0
    %1343 = vmatprep.subr.bf16.mxu0 0
    %1344 = vmatpush1.bf16.xpose.msra.mxu0 0
    %1345 = vmatprep.subr.bf16.mxu0 0
    %1346 = vmatpush1.bf16.xpose.msra.mxu0 0
    %1347 = vmatprep.subr.bf16.mxu0 0
    %1348 = vmatpush1.bf16.xpose.msra.mxu0 0
    %1349 = vmatprep.subr.bf16.mxu0 0
    %1350 = vmatpush1.bf16.xpose.msra.mxu0 %v1333
    %1351 = vmatprep.subr.bf16.mxu0 0
    %1352 = vmatpush2.bf16.xpose.msra.mxu0 0
    %1353 = vmatprep.subr.bf16.mxu0 0
    %1354 = vmatpush2.bf16.xpose.msra.mxu0 0
    %1355 = vmatprep.subr.bf16.mxu0 0
    %1356 = vmatpush2.bf16.xpose.msra.mxu0 0
    %1357 = vmatprep.subr.bf16.mxu0 0
    %1358 = vmatpush2.bf16.xpose.msra.mxu0 0
    %1359 = vmatprep.subr.bf16.mxu0 0
    %1360 = vmatpush2.bf16.xpose.msra.mxu0 0
    %1361 = vmatprep.subr.bf16.mxu0 0
    %1362 = vmatpush2.bf16.xpose.msra.mxu0 0
    %1363 = vmatprep.subr.bf16.mxu0 0
    %1364 = vmatpush2.bf16.xpose.msra.mxu0 0
    %1365 = vmatprep.subr.bf16.mxu0 0
    %1366 = vmatpush2.bf16.xpose.msra.mxu0 0
    %1367 = vmatprep.mubr.bf16.mxu0 0
    %1368 = vmatmul.mubr.bf16.gmra.mxu0 %v1330
    %v1369 = vpop.f32.mrf.mxu0
    %v1370 = vadd.f32 %v1221, %v1369
    %v1371 = vpop.f32.mrf.mxu0
    %v1372 = vpop.f32.mrf.mxu0
    %v1373 = vadd.f32 %v1222, %v1372
    %v1374 = vpop.f32.mrf.mxu0
    %1375 = vdwg.mxu0
    %1376 = vrot.lane.b32.xlu0 %v252, 112
    %v1377 = vpop.permute.xlu0 %1376
    %1378 = vrot.lane.b32.xlu0 %v252, 80
    %v1379 = vpop.permute.xlu0 %1378
    %v1381 = vsel %vm262, %v1377, 0
    %v1384 = vsel %vm262, %v1379, 0
    %1386 = vmatprep.subr.bf16.mxu0 0
    %1387 = vmatpush1.bf16.xpose.msra.mxu0 0
    %1388 = vmatprep.subr.bf16.mxu0 0
    %1389 = vmatpush1.bf16.xpose.msra.mxu0 0
    %1390 = vmatprep.subr.bf16.mxu0 0
    %1391 = vmatpush1.bf16.xpose.msra.mxu0 0
    %1392 = vmatprep.subr.bf16.mxu0 0
    %1393 = vmatpush1.bf16.xpose.msra.mxu0 0
    %1394 = vmatprep.subr.bf16.mxu0 0
    %1395 = vmatpush1.bf16.xpose.msra.mxu0 0
    %1396 = vmatprep.subr.bf16.mxu0 0
    %1397 = vmatpush1.bf16.xpose.msra.mxu0 0
    %1398 = vmatprep.subr.bf16.mxu0 0
    %1399 = vmatpush1.bf16.xpose.msra.mxu0 0
    %1400 = vmatprep.subr.bf16.mxu0 0
    %1401 = vmatpush1.bf16.xpose.msra.mxu0 %v1384
    %1402 = vmatprep.subr.bf16.mxu0 0
    %1403 = vmatpush2.bf16.xpose.msra.mxu0 0
    %1404 = vmatprep.subr.bf16.mxu0 0
    %1405 = vmatpush2.bf16.xpose.msra.mxu0 0
    %1406 = vmatprep.subr.bf16.mxu0 0
    %1407 = vmatpush2.bf16.xpose.msra.mxu0 0
    %1408 = vmatprep.subr.bf16.mxu0 0
    %1409 = vmatpush2.bf16.xpose.msra.mxu0 0
    %1410 = vmatprep.subr.bf16.mxu0 0
    %1411 = vmatpush2.bf16.xpose.msra.mxu0 0
    %1412 = vmatprep.subr.bf16.mxu0 0
    %1413 = vmatpush2.bf16.xpose.msra.mxu0 0
    %1414 = vmatprep.subr.bf16.mxu0 0
    %1415 = vmatpush2.bf16.xpose.msra.mxu0 0
    %1416 = vmatprep.subr.bf16.mxu0 0
    %1417 = vmatpush2.bf16.xpose.msra.mxu0 0
    %1418 = vmatprep.mubr.bf16.mxu0 0
    %1419 = vmatmul.mubr.bf16.gmra.mxu0 %v1381
    %v1420 = vpop.f32.mrf.mxu0
    %v1421 = vadd.f32 %v1221, %v1420
    %v1422 = vpop.f32.mrf.mxu0
    %v1423 = vpop.f32.mrf.mxu0
    %v1424 = vadd.f32 %v1222, %v1423
    %v1425 = vpop.f32.mrf.mxu0
    %1426 = vdwg.mxu0
    %1427 = vrot.lane.b32.xlu0 %v253, 112
    %v1428 = vpop.permute.xlu0 %1427
    %1429 = vrot.lane.b32.xlu0 %v253, 80
    %v1430 = vpop.permute.xlu0 %1429
    %v1432 = vsel %vm262, %v1428, 0
    %v1435 = vsel %vm262, %v1430, 0
    %1437 = vmatprep.subr.bf16.mxu0 0
    %1438 = vmatpush1.bf16.xpose.msra.mxu0 0
    %1439 = vmatprep.subr.bf16.mxu0 0
    %1440 = vmatpush1.bf16.xpose.msra.mxu0 0
    %1441 = vmatprep.subr.bf16.mxu0 0
    %1442 = vmatpush1.bf16.xpose.msra.mxu0 0
    %1443 = vmatprep.subr.bf16.mxu0 0
    %1444 = vmatpush1.bf16.xpose.msra.mxu0 0
    %1445 = vmatprep.subr.bf16.mxu0 0
    %1446 = vmatpush1.bf16.xpose.msra.mxu0 0
    %1447 = vmatprep.subr.bf16.mxu0 0
    %1448 = vmatpush1.bf16.xpose.msra.mxu0 0
    %1449 = vmatprep.subr.bf16.mxu0 0
    %1450 = vmatpush1.bf16.xpose.msra.mxu0 0
    %1451 = vmatprep.subr.bf16.mxu0 0
    %1452 = vmatpush1.bf16.xpose.msra.mxu0 %v1435
    %1453 = vmatprep.subr.bf16.mxu0 0
    %1454 = vmatpush2.bf16.xpose.msra.mxu0 0
    %1455 = vmatprep.subr.bf16.mxu0 0
    %1456 = vmatpush2.bf16.xpose.msra.mxu0 0
    %1457 = vmatprep.subr.bf16.mxu0 0
    %1458 = vmatpush2.bf16.xpose.msra.mxu0 0
    %1459 = vmatprep.subr.bf16.mxu0 0
    %1460 = vmatpush2.bf16.xpose.msra.mxu0 0
    %1461 = vmatprep.subr.bf16.mxu0 0
    %1462 = vmatpush2.bf16.xpose.msra.mxu0 0
    %1463 = vmatprep.subr.bf16.mxu0 0
    %1464 = vmatpush2.bf16.xpose.msra.mxu0 0
    %1465 = vmatprep.subr.bf16.mxu0 0
    %1466 = vmatpush2.bf16.xpose.msra.mxu0 0
    %1467 = vmatprep.subr.bf16.mxu0 0
    %1468 = vmatpush2.bf16.xpose.msra.mxu0 0
    %1469 = vmatprep.mubr.bf16.mxu0 0
    %1470 = vmatmul.mubr.bf16.gmra.mxu0 %v1432
    %v1471 = vpop.f32.mrf.mxu0
    %v1472 = vadd.f32 %v1221, %v1471
    %v1473 = vpop.f32.mrf.mxu0
    %v1474 = vpop.f32.mrf.mxu0
    %v1475 = vadd.f32 %v1222, %v1474
    %v1476 = vpop.f32.mrf.mxu0
    %1477 = vdwg.mxu0
    %1478 = vrot.lane.b32.xlu0 %v254, 112
    %v1479 = vpop.permute.xlu0 %1478
    %1480 = vrot.lane.b32.xlu0 %v254, 80
    %v1481 = vpop.permute.xlu0 %1480
    %v1483 = vsel %vm262, %v1479, 0
    %v1486 = vsel %vm262, %v1481, 0
    %1488 = vmatprep.subr.bf16.mxu0 0
    %1489 = vmatpush1.bf16.xpose.msra.mxu0 0
    %1490 = vmatprep.subr.bf16.mxu0 0
    %1491 = vmatpush1.bf16.xpose.msra.mxu0 0
    %1492 = vmatprep.subr.bf16.mxu0 0
    %1493 = vmatpush1.bf16.xpose.msra.mxu0 0
    %1494 = vmatprep.subr.bf16.mxu0 0
    %1495 = vmatpush1.bf16.xpose.msra.mxu0 0
    %1496 = vmatprep.subr.bf16.mxu0 0
    %1497 = vmatpush1.bf16.xpose.msra.mxu0 0
    %1498 = vmatprep.subr.bf16.mxu0 0
    %1499 = vmatpush1.bf16.xpose.msra.mxu0 0
    %1500 = vmatprep.subr.bf16.mxu0 0
    %1501 = vmatpush1.bf16.xpose.msra.mxu0 0
    %1502 = vmatprep.subr.bf16.mxu0 0
    %1503 = vmatpush1.bf16.xpose.msra.mxu0 %v1486
    %1504 = vmatprep.subr.bf16.mxu0 0
    %1505 = vmatpush2.bf16.xpose.msra.mxu0 0
    %1506 = vmatprep.subr.bf16.mxu0 0
    %1507 = vmatpush2.bf16.xpose.msra.mxu0 0
    %1508 = vmatprep.subr.bf16.mxu0 0
    %1509 = vmatpush2.bf16.xpose.msra.mxu0 0
    %1510 = vmatprep.subr.bf16.mxu0 0
    %1511 = vmatpush2.bf16.xpose.msra.mxu0 0
    %1512 = vmatprep.subr.bf16.mxu0 0
    %1513 = vmatpush2.bf16.xpose.msra.mxu0 0
    %1514 = vmatprep.subr.bf16.mxu0 0
    %1515 = vmatpush2.bf16.xpose.msra.mxu0 0
    %1516 = vmatprep.subr.bf16.mxu0 0
    %1517 = vmatpush2.bf16.xpose.msra.mxu0 0
    %1518 = vmatprep.subr.bf16.mxu0 0
    %1519 = vmatpush2.bf16.xpose.msra.mxu0 0
    %1520 = vmatprep.mubr.bf16.mxu0 0
    %1521 = vmatmul.mubr.bf16.gmra.mxu0 %v1483
    %v1522 = vpop.f32.mrf.mxu0
    %v1523 = vadd.f32 %v1221, %v1522
    %v1524 = vpop.f32.mrf.mxu0
    %v1525 = vpop.f32.mrf.mxu0
    %v1526 = vadd.f32 %v1222, %v1525
    %v1527 = vpop.f32.mrf.mxu0
    %1528 = vdwg.mxu0
    %1529 = vrot.lane.b32.xlu0 %v255, 112
    %v1530 = vpop.permute.xlu0 %1529
    %1531 = vrot.lane.b32.xlu0 %v255, 80
    %v1532 = vpop.permute.xlu0 %1531
    %v1534 = vsel %vm262, %v1530, 0
    %v1537 = vsel %vm262, %v1532, 0
    %1539 = vmatprep.subr.bf16.mxu0 0
    %1540 = vmatpush1.bf16.xpose.msra.mxu0 0
    %1541 = vmatprep.subr.bf16.mxu0 0
    %1542 = vmatpush1.bf16.xpose.msra.mxu0 0
    %1543 = vmatprep.subr.bf16.mxu0 0
    %1544 = vmatpush1.bf16.xpose.msra.mxu0 0
    %1545 = vmatprep.subr.bf16.mxu0 0
    %1546 = vmatpush1.bf16.xpose.msra.mxu0 0
    %1547 = vmatprep.subr.bf16.mxu0 0
    %1548 = vmatpush1.bf16.xpose.msra.mxu0 0
    %1549 = vmatprep.subr.bf16.mxu0 0
    %1550 = vmatpush1.bf16.xpose.msra.mxu0 0
    %1551 = vmatprep.subr.bf16.mxu0 0
    %1552 = vmatpush1.bf16.xpose.msra.mxu0 0
    %1553 = vmatprep.subr.bf16.mxu0 0
    %1554 = vmatpush1.bf16.xpose.msra.mxu0 %v1537
    %1555 = vmatprep.subr.bf16.mxu0 0
    %1556 = vmatpush2.bf16.xpose.msra.mxu0 0
    %1557 = vmatprep.subr.bf16.mxu0 0
    %1558 = vmatpush2.bf16.xpose.msra.mxu0 0
    %1559 = vmatprep.subr.bf16.mxu0 0
    %1560 = vmatpush2.bf16.xpose.msra.mxu0 0
    %1561 = vmatprep.subr.bf16.mxu0 0
    %1562 = vmatpush2.bf16.xpose.msra.mxu0 0
    %1563 = vmatprep.subr.bf16.mxu0 0
    %1564 = vmatpush2.bf16.xpose.msra.mxu0 0
    %1565 = vmatprep.subr.bf16.mxu0 0
    %1566 = vmatpush2.bf16.xpose.msra.mxu0 0
    %1567 = vmatprep.subr.bf16.mxu0 0
    %1568 = vmatpush2.bf16.xpose.msra.mxu0 0
    %1569 = vmatprep.subr.bf16.mxu0 0
    %1570 = vmatpush2.bf16.xpose.msra.mxu0 0
    %1571 = vmatprep.mubr.bf16.mxu0 0
    %1572 = vmatmul.mubr.bf16.gmra.mxu0 %v1534
    %v1573 = vpop.f32.mrf.mxu0
    %v1574 = vadd.f32 %v1221, %v1573
    %v1575 = vpop.f32.mrf.mxu0
    %v1576 = vpop.f32.mrf.mxu0
    %v1577 = vadd.f32 %v1222, %v1576
    %v1578 = vpop.f32.mrf.mxu0
    %1579 = vdwg.mxu0
    %1580 = vrot.lane.b32.xlu0 %v256, 112
    %v1581 = vpop.permute.xlu0 %1580
    %1582 = vrot.lane.b32.xlu0 %v256, 80
    %v1583 = vpop.permute.xlu0 %1582
    %v1585 = vsel %vm262, %v1581, 0
    %v1588 = vsel %vm262, %v1583, 0
    %1590 = vmatprep.subr.bf16.mxu0 0
    %1591 = vmatpush1.bf16.xpose.msra.mxu0 0
    %1592 = vmatprep.subr.bf16.mxu0 0
    %1593 = vmatpush1.bf16.xpose.msra.mxu0 0
    %1594 = vmatprep.subr.bf16.mxu0 0
    %1595 = vmatpush1.bf16.xpose.msra.mxu0 0
    %1596 = vmatprep.subr.bf16.mxu0 0
    %1597 = vmatpush1.bf16.xpose.msra.mxu0 0
    %1598 = vmatprep.subr.bf16.mxu0 0
    %1599 = vmatpush1.bf16.xpose.msra.mxu0 0
    %1600 = vmatprep.subr.bf16.mxu0 0
    %1601 = vmatpush1.bf16.xpose.msra.mxu0 0
    %1602 = vmatprep.subr.bf16.mxu0 0
    %1603 = vmatpush1.bf16.xpose.msra.mxu0 0
    %1604 = vmatprep.subr.bf16.mxu0 0
    %1605 = vmatpush1.bf16.xpose.msra.mxu0 %v1588
    %1606 = vmatprep.subr.bf16.mxu0 0
    %1607 = vmatpush2.bf16.xpose.msra.mxu0 0
    %1608 = vmatprep.subr.bf16.mxu0 0
    %1609 = vmatpush2.bf16.xpose.msra.mxu0 0
    %1610 = vmatprep.subr.bf16.mxu0 0
    %1611 = vmatpush2.bf16.xpose.msra.mxu0 0
    %1612 = vmatprep.subr.bf16.mxu0 0
    %1613 = vmatpush2.bf16.xpose.msra.mxu0 0
    %1614 = vmatprep.subr.bf16.mxu0 0
    %1615 = vmatpush2.bf16.xpose.msra.mxu0 0
    %1616 = vmatprep.subr.bf16.mxu0 0
    %1617 = vmatpush2.bf16.xpose.msra.mxu0 0
    %1618 = vmatprep.subr.bf16.mxu0 0
    %1619 = vmatpush2.bf16.xpose.msra.mxu0 0
    %1620 = vmatprep.subr.bf16.mxu0 0
    %1621 = vmatpush2.bf16.xpose.msra.mxu0 0
    %1622 = vmatprep.mubr.bf16.mxu0 0
    %1623 = vmatmul.mubr.bf16.gmra.mxu0 %v1585
    %v1624 = vpop.f32.mrf.mxu0
    %v1625 = vadd.f32 %v1221, %v1624
    %v1626 = vpop.f32.mrf.mxu0
    %v1627 = vpop.f32.mrf.mxu0
    %v1628 = vadd.f32 %v1222, %v1627
    %v1629 = vpop.f32.mrf.mxu0
    %1630 = vdwg.mxu0
    %v1631 = vsel %vm262, %v1268, -inf
    %1632 = vmax.xlane.f32.xlu0 %v1631
    %v1633 = vpop.xlane.xlu0 %1632
    %v1634 = vsel %vm262, %v1271, -inf
    %1635 = vmax.xlane.f32.xlu0 %v1634
    %v1636 = vpop.xlane.xlu0 %1635
    %v1637 = vsel %vm262, %v1319, -inf
    %1638 = vmax.xlane.f32.xlu0 %v1637
    %v1639 = vpop.xlane.xlu0 %1638
    %v1640 = vsel %vm262, %v1322, -inf
    %1641 = vmax.xlane.f32.xlu0 %v1640
    %v1642 = vpop.xlane.xlu0 %1641
    %v1643 = vsel %vm262, %v1370, -inf
    %1644 = vmax.xlane.f32.xlu0 %v1643
    %v1645 = vpop.xlane.xlu0 %1644
    %v1646 = vsel %vm262, %v1373, -inf
    %1647 = vmax.xlane.f32.xlu0 %v1646
    %v1648 = vpop.xlane.xlu0 %1647
    %v1649 = vsel %vm262, %v1421, -inf
    %1650 = vmax.xlane.f32.xlu0 %v1649
    %v1651 = vpop.xlane.xlu0 %1650
    %v1652 = vsel %vm262, %v1424, -inf
    %1653 = vmax.xlane.f32.xlu0 %v1652
    %v1654 = vpop.xlane.xlu0 %1653
    %v1655 = vsel %vm262, %v1472, -inf
    %1656 = vmax.xlane.f32.xlu0 %v1655
    %v1657 = vpop.xlane.xlu0 %1656
    %v1658 = vsel %vm262, %v1475, -inf
    %1659 = vmax.xlane.f32.xlu0 %v1658
    %v1660 = vpop.xlane.xlu0 %1659
    %v1661 = vsel %vm262, %v1523, -inf
    %1662 = vmax.xlane.f32.xlu0 %v1661
    %v1663 = vpop.xlane.xlu0 %1662
    %v1664 = vsel %vm262, %v1526, -inf
    %1665 = vmax.xlane.f32.xlu0 %v1664
    %v1666 = vpop.xlane.xlu0 %1665
    %v1667 = vsel %vm262, %v1574, -inf
    %1668 = vmax.xlane.f32.xlu0 %v1667
    %v1669 = vpop.xlane.xlu0 %1668
    %v1670 = vsel %vm262, %v1577, -inf
    %1671 = vmax.xlane.f32.xlu0 %v1670
    %v1672 = vpop.xlane.xlu0 %1671
    %v1673 = vsel %vm262, %v1625, -inf
    %1674 = vmax.xlane.f32.xlu0 %v1673
    %v1675 = vpop.xlane.xlu0 %1674
    %v1676 = vsel %vm262, %v1628, -inf
    %1677 = vmax.xlane.f32.xlu0 %v1676
    %v1678 = vpop.xlane.xlu0 %1677
    %v1679 = vsub.f32 %v1268, %v1633
    %v1680 = vsub.f32 %v1271, %v1636
    %v1681 = vsub.f32 %v1319, %v1639
    %v1682 = vsub.f32 %v1322, %v1642
    %v1683 = vsub.f32 %v1370, %v1645
    %v1684 = vsub.f32 %v1373, %v1648
    %v1685 = vsub.f32 %v1421, %v1651
    %v1686 = vsub.f32 %v1424, %v1654
    %v1687 = vsub.f32 %v1472, %v1657
    %v1688 = vsub.f32 %v1475, %v1660
    %v1689 = vsub.f32 %v1523, %v1663
    %v1690 = vsub.f32 %v1526, %v1666
    %v1691 = vsub.f32 %v1574, %v1669
    %v1692 = vsub.f32 %v1577, %v1672
    %v1693 = vsub.f32 %v1625, %v1675
    %v1694 = vsub.f32 %v1628, %v1678
    %v1695 = vmul.f32 %v1679, 1.442695
    %v1696 = vpow.pop %v1695
    %v1697 = vmul.f32 %v1680, 1.442695
    %v1698 = vpow.pop %v1697
    %v1699 = vmul.f32 %v1681, 1.442695
    %v1700 = vpow.pop %v1699
    %v1701 = vmul.f32 %v1682, 1.442695
    %v1702 = vpow.pop %v1701
    %v1703 = vmul.f32 %v1683, 1.442695
    %v1704 = vpow.pop %v1703
    %v1705 = vmul.f32 %v1684, 1.442695
    %v1706 = vpow.pop %v1705
    %v1707 = vmul.f32 %v1685, 1.442695
    %v1708 = vpow.pop %v1707
    %v1709 = vmul.f32 %v1686, 1.442695
    %v1710 = vpow.pop %v1709
    %v1711 = vmul.f32 %v1687, 1.442695
    %v1712 = vpow.pop %v1711
    %v1713 = vmul.f32 %v1688, 1.442695
    %v1714 = vpow.pop %v1713
    %v1715 = vmul.f32 %v1689, 1.442695
    %v1716 = vpow.pop %v1715
    %v1717 = vmul.f32 %v1690, 1.442695
    %v1718 = vpow.pop %v1717
    %v1719 = vmul.f32 %v1691, 1.442695
    %v1720 = vpow.pop %v1719
    %v1721 = vmul.f32 %v1692, 1.442695
    %v1722 = vpow.pop %v1721
    %v1723 = vmul.f32 %v1693, 1.442695
    %v1724 = vpow.pop %v1723
    %v1725 = vmul.f32 %v1694, 1.442695
    %v1726 = vpow.pop %v1725
    %v1727 = vsel %vm262, %v1696, 0.0
    %1728 = vadd.xlane.f32.xlu0 %v1727
    %v1729 = vpop.xlane.xlu0 %1728
    %v1730 = vsel %vm262, %v1698, 0.0
    %1731 = vadd.xlane.f32.xlu0 %v1730
    %v1732 = vpop.xlane.xlu0 %1731
    %v1733 = vsel %vm262, %v1700, 0.0
    %1734 = vadd.xlane.f32.xlu0 %v1733
    %v1735 = vpop.xlane.xlu0 %1734
    %v1736 = vsel %vm262, %v1702, 0.0
    %1737 = vadd.xlane.f32.xlu0 %v1736
    %v1738 = vpop.xlane.xlu0 %1737
    %v1739 = vsel %vm262, %v1704, 0.0
    %1740 = vadd.xlane.f32.xlu0 %v1739
    %v1741 = vpop.xlane.xlu0 %1740
    %v1742 = vsel %vm262, %v1706, 0.0
    %1743 = vadd.xlane.f32.xlu0 %v1742
    %v1744 = vpop.xlane.xlu0 %1743
    %v1745 = vsel %vm262, %v1708, 0.0
    %1746 = vadd.xlane.f32.xlu0 %v1745
    %v1747 = vpop.xlane.xlu0 %1746
    %v1748 = vsel %vm262, %v1710, 0.0
    %1749 = vadd.xlane.f32.xlu0 %v1748
    %v1750 = vpop.xlane.xlu0 %1749
    %v1751 = vsel %vm262, %v1712, 0.0
    %1752 = vadd.xlane.f32.xlu0 %v1751
    %v1753 = vpop.xlane.xlu0 %1752
    %v1754 = vsel %vm262, %v1714, 0.0
    %1755 = vadd.xlane.f32.xlu0 %v1754
    %v1756 = vpop.xlane.xlu0 %1755
    %v1757 = vsel %vm262, %v1716, 0.0
    %1758 = vadd.xlane.f32.xlu0 %v1757
    %v1759 = vpop.xlane.xlu0 %1758
    %v1760 = vsel %vm262, %v1718, 0.0
    %1761 = vadd.xlane.f32.xlu0 %v1760
    %v1762 = vpop.xlane.xlu0 %1761
    %v1763 = vsel %vm262, %v1720, 0.0
    %1764 = vadd.xlane.f32.xlu0 %v1763
    %v1765 = vpop.xlane.xlu0 %1764
    %v1766 = vsel %vm262, %v1722, 0.0
    %1767 = vadd.xlane.f32.xlu0 %v1766
    %v1768 = vpop.xlane.xlu0 %1767
    %v1769 = vsel %vm262, %v1724, 0.0
    %1770 = vadd.xlane.f32.xlu0 %v1769
    %v1771 = vpop.xlane.xlu0 %1770
    %v1772 = vsel %vm262, %v1726, 0.0
    %1773 = vadd.xlane.f32.xlu0 %v1772
    %v1774 = vpop.xlane.xlu0 %1773
    %v1775 = vrcp.pop %v1729
    %v1776 = vrcp.pop %v1732
    %v1777 = vrcp.pop %v1735
    %v1778 = vrcp.pop %v1738
    %v1779 = vrcp.pop %v1741
    %v1780 = vrcp.pop %v1744
    %v1781 = vrcp.pop %v1747
    %v1782 = vrcp.pop %v1750
    %v1783 = vrcp.pop %v1753
    %v1784 = vrcp.pop %v1756
    %v1785 = vrcp.pop %v1759
    %v1786 = vrcp.pop %v1762
    %v1787 = vrcp.pop %v1765
    %v1788 = vrcp.pop %v1768
    %v1789 = vrcp.pop %v1771
    %v1790 = vrcp.pop %v1774
    %v1791 = vmul.f32 %v1696, %v1775
    %v1792 = vmul.f32 %v1698, %v1776
    %v1793 = vmul.f32 %v1700, %v1777
    %v1794 = vmul.f32 %v1702, %v1778
    %v1795 = vmul.f32 %v1704, %v1779
    %v1796 = vmul.f32 %v1706, %v1780
    %v1797 = vmul.f32 %v1708, %v1781
    %v1798 = vmul.f32 %v1710, %v1782
    %v1799 = vmul.f32 %v1712, %v1783
    %v1800 = vmul.f32 %v1714, %v1784
    %v1801 = vmul.f32 %v1716, %v1785
    %v1802 = vmul.f32 %v1718, %v1786
    %v1803 = vmul.f32 %v1720, %v1787
    %v1804 = vmul.f32 %v1722, %v1788
    %v1805 = vmul.f32 %v1724, %v1789
    %v1806 = vmul.f32 %v1726, %v1790
    %v1807 = vpack.c.bf16 %v1792, %v1791
    %v1808 = vpack.c.bf16 %v1794, %v1793
    %v1809 = vpack.c.bf16 %v1796, %v1795
    %v1810 = vpack.c.bf16 %v1798, %v1797
    %v1811 = vpack.c.bf16 %v1800, %v1799
    %v1812 = vpack.c.bf16 %v1802, %v1801
    %v1813 = vpack.c.bf16 %v1804, %v1803
    %v1814 = vpack.c.bf16 %v1806, %v1805
    %1815 = vrot.lane.b32.xlu0 %v249, 48
    %v1816 = vpop.permute.xlu0 %1815
    %v1819 = vsel %vm262, %v1807, 0
    %1821 = vmatprep.subr.bf16.mxu0 0
    %1822 = vmatpush1.bf16.msra.mxu0 0
    %1823 = vmatprep.subr.bf16.mxu0 0
    %1824 = vmatpush1.bf16.msra.mxu0 0
    %1825 = vmatprep.subr.bf16.mxu0 0
    %1826 = vmatpush1.bf16.msra.mxu0 0
    %1827 = vmatprep.subr.bf16.mxu0 0
    %1828 = vmatpush1.bf16.msra.mxu0 0
    %1829 = vmatprep.subr.bf16.mxu0 0
    %1830 = vmatpush1.bf16.msra.mxu0 0
    %1831 = vmatprep.subr.bf16.mxu0 0
    %1832 = vmatpush1.bf16.msra.mxu0 0
    %1833 = vmatprep.subr.bf16.mxu0 0
    %1834 = vmatpush1.bf16.msra.mxu0 0
    %1835 = vmatprep.subr.bf16.mxu0 0
    %1836 = vmatpush1.bf16.msra.mxu0 %v1816
    %1837 = vmatprep.subr.bf16.mxu0 0
    %1838 = vmatpush2.bf16.msra.mxu0 0
    %1839 = vmatprep.subr.bf16.mxu0 0
    %1840 = vmatpush2.bf16.msra.mxu0 0
    %1841 = vmatprep.subr.bf16.mxu0 0
    %1842 = vmatpush2.bf16.msra.mxu0 0
    %1843 = vmatprep.subr.bf16.mxu0 0
    %1844 = vmatpush2.bf16.msra.mxu0 0
    %1845 = vmatprep.subr.bf16.mxu0 0
    %1846 = vmatpush2.bf16.msra.mxu0 0
    %1847 = vmatprep.subr.bf16.mxu0 0
    %1848 = vmatpush2.bf16.msra.mxu0 0
    %1849 = vmatprep.subr.bf16.mxu0 0
    %1850 = vmatpush2.bf16.msra.mxu0 0
    %1851 = vmatprep.subr.bf16.mxu0 0
    %1852 = vmatpush2.bf16.msra.mxu0 0
    %1853 = vmatprep.mubr.bf16.mxu0 0
    %1854 = vmatmul.mubr.bf16.gmra.mxu0 %v1819
    %v1855 = vpop.f32.mrf.mxu0
    %v1856 = vadd.f32 0.0, %v1855
    %v1857 = vpop.f32.mrf.mxu0
    %v1858 = vpop.f32.mrf.mxu0
    %v1859 = vadd.f32 0.0, %v1858
    %v1860 = vpop.f32.mrf.mxu0
    %1861 = vdwg.mxu0
    %1862 = vrot.lane.b32.xlu0 %v250, 48
    %v1863 = vpop.permute.xlu0 %1862
    %v1866 = vsel %vm262, %v1808, 0
    %1868 = vmatprep.subr.bf16.mxu0 0
    %1869 = vmatpush1.bf16.msra.mxu0 0
    %1870 = vmatprep.subr.bf16.mxu0 0
    %1871 = vmatpush1.bf16.msra.mxu0 0
    %1872 = vmatprep.subr.bf16.mxu0 0
    %1873 = vmatpush1.bf16.msra.mxu0 0
    %1874 = vmatprep.subr.bf16.mxu0 0
    %1875 = vmatpush1.bf16.msra.mxu0 0
    %1876 = vmatprep.subr.bf16.mxu0 0
    %1877 = vmatpush1.bf16.msra.mxu0 0
    %1878 = vmatprep.subr.bf16.mxu0 0
    %1879 = vmatpush1.bf16.msra.mxu0 0
    %1880 = vmatprep.subr.bf16.mxu0 0
    %1881 = vmatpush1.bf16.msra.mxu0 0
    %1882 = vmatprep.subr.bf16.mxu0 0
    %1883 = vmatpush1.bf16.msra.mxu0 %v1863
    %1884 = vmatprep.subr.bf16.mxu0 0
    %1885 = vmatpush2.bf16.msra.mxu0 0
    %1886 = vmatprep.subr.bf16.mxu0 0
    %1887 = vmatpush2.bf16.msra.mxu0 0
    %1888 = vmatprep.subr.bf16.mxu0 0
    %1889 = vmatpush2.bf16.msra.mxu0 0
    %1890 = vmatprep.subr.bf16.mxu0 0
    %1891 = vmatpush2.bf16.msra.mxu0 0
    %1892 = vmatprep.subr.bf16.mxu0 0
    %1893 = vmatpush2.bf16.msra.mxu0 0
    %1894 = vmatprep.subr.bf16.mxu0 0
    %1895 = vmatpush2.bf16.msra.mxu0 0
    %1896 = vmatprep.subr.bf16.mxu0 0
    %1897 = vmatpush2.bf16.msra.mxu0 0
    %1898 = vmatprep.subr.bf16.mxu0 0
    %1899 = vmatpush2.bf16.msra.mxu0 0
    %1900 = vmatprep.mubr.bf16.mxu0 0
    %1901 = vmatmul.mubr.bf16.gmra.mxu0 %v1866
    %v1902 = vpop.f32.mrf.mxu0
    %v1903 = vadd.f32 0.0, %v1902
    %v1904 = vpop.f32.mrf.mxu0
    %v1905 = vpop.f32.mrf.mxu0
    %v1906 = vadd.f32 0.0, %v1905
    %v1907 = vpop.f32.mrf.mxu0
    %1908 = vdwg.mxu0
    %1909 = vrot.lane.b32.xlu0 %v251, 48
    %v1910 = vpop.permute.xlu0 %1909
    %v1913 = vsel %vm262, %v1809, 0
    %1915 = vmatprep.subr.bf16.mxu0 0
    %1916 = vmatpush1.bf16.msra.mxu0 0
    %1917 = vmatprep.subr.bf16.mxu0 0
    %1918 = vmatpush1.bf16.msra.mxu0 0
    %1919 = vmatprep.subr.bf16.mxu0 0
    %1920 = vmatpush1.bf16.msra.mxu0 0
    %1921 = vmatprep.subr.bf16.mxu0 0
    %1922 = vmatpush1.bf16.msra.mxu0 0
    %1923 = vmatprep.subr.bf16.mxu0 0
    %1924 = vmatpush1.bf16.msra.mxu0 0
    %1925 = vmatprep.subr.bf16.mxu0 0
    %1926 = vmatpush1.bf16.msra.mxu0 0
    %1927 = vmatprep.subr.bf16.mxu0 0
    %1928 = vmatpush1.bf16.msra.mxu0 0
    %1929 = vmatprep.subr.bf16.mxu0 0
    %1930 = vmatpush1.bf16.msra.mxu0 %v1910
    %1931 = vmatprep.subr.bf16.mxu0 0
    %1932 = vmatpush2.bf16.msra.mxu0 0
    %1933 = vmatprep.subr.bf16.mxu0 0
    %1934 = vmatpush2.bf16.msra.mxu0 0
    %1935 = vmatprep.subr.bf16.mxu0 0
    %1936 = vmatpush2.bf16.msra.mxu0 0
    %1937 = vmatprep.subr.bf16.mxu0 0
    %1938 = vmatpush2.bf16.msra.mxu0 0
    %1939 = vmatprep.subr.bf16.mxu0 0
    %1940 = vmatpush2.bf16.msra.mxu0 0
    %1941 = vmatprep.subr.bf16.mxu0 0
    %1942 = vmatpush2.bf16.msra.mxu0 0
    %1943 = vmatprep.subr.bf16.mxu0 0
    %1944 = vmatpush2.bf16.msra.mxu0 0
    %1945 = vmatprep.subr.bf16.mxu0 0
    %1946 = vmatpush2.bf16.msra.mxu0 0
    %1947 = vmatprep.mubr.bf16.mxu0 0
    %1948 = vmatmul.mubr.bf16.gmra.mxu0 %v1913
    %v1949 = vpop.f32.mrf.mxu0
    %v1950 = vadd.f32 0.0, %v1949
    %v1951 = vpop.f32.mrf.mxu0
    %v1952 = vpop.f32.mrf.mxu0
    %v1953 = vadd.f32 0.0, %v1952
    %v1954 = vpop.f32.mrf.mxu0
    %1955 = vdwg.mxu0
    %1956 = vrot.lane.b32.xlu0 %v252, 48
    %v1957 = vpop.permute.xlu0 %1956
    %v1960 = vsel %vm262, %v1810, 0
    %1962 = vmatprep.subr.bf16.mxu0 0
    %1963 = vmatpush1.bf16.msra.mxu0 0
    %1964 = vmatprep.subr.bf16.mxu0 0
    %1965 = vmatpush1.bf16.msra.mxu0 0
    %1966 = vmatprep.subr.bf16.mxu0 0
    %1967 = vmatpush1.bf16.msra.mxu0 0
    %1968 = vmatprep.subr.bf16.mxu0 0
    %1969 = vmatpush1.bf16.msra.mxu0 0
    %1970 = vmatprep.subr.bf16.mxu0 0
    %1971 = vmatpush1.bf16.msra.mxu0 0
    %1972 = vmatprep.subr.bf16.mxu0 0
    %1973 = vmatpush1.bf16.msra.mxu0 0
    %1974 = vmatprep.subr.bf16.mxu0 0
    %1975 = vmatpush1.bf16.msra.mxu0 0
    %1976 = vmatprep.subr.bf16.mxu0 0
    %1977 = vmatpush1.bf16.msra.mxu0 %v1957
    %1978 = vmatprep.subr.bf16.mxu0 0
    %1979 = vmatpush2.bf16.msra.mxu0 0
    %1980 = vmatprep.subr.bf16.mxu0 0
    %1981 = vmatpush2.bf16.msra.mxu0 0
    %1982 = vmatprep.subr.bf16.mxu0 0
    %1983 = vmatpush2.bf16.msra.mxu0 0
    %1984 = vmatprep.subr.bf16.mxu0 0
    %1985 = vmatpush2.bf16.msra.mxu0 0
    %1986 = vmatprep.subr.bf16.mxu0 0
    %1987 = vmatpush2.bf16.msra.mxu0 0
    %1988 = vmatprep.subr.bf16.mxu0 0
    %1989 = vmatpush2.bf16.msra.mxu0 0
    %1990 = vmatprep.subr.bf16.mxu0 0
    %1991 = vmatpush2.bf16.msra.mxu0 0
    %1992 = vmatprep.subr.bf16.mxu0 0
    %1993 = vmatpush2.bf16.msra.mxu0 0
    %1994 = vmatprep.mubr.bf16.mxu0 0
    %1995 = vmatmul.mubr.bf16.gmra.mxu0 %v1960
    %v1996 = vpop.f32.mrf.mxu0
    %v1997 = vadd.f32 0.0, %v1996
    %v1998 = vpop.f32.mrf.mxu0
    %v1999 = vpop.f32.mrf.mxu0
    %v2000 = vadd.f32 0.0, %v1999
    %v2001 = vpop.f32.mrf.mxu0
    %2002 = vdwg.mxu0
    %2003 = vrot.lane.b32.xlu0 %v253, 48
    %v2004 = vpop.permute.xlu0 %2003
    %v2007 = vsel %vm262, %v1811, 0
    %2009 = vmatprep.subr.bf16.mxu0 0
    %2010 = vmatpush1.bf16.msra.mxu0 0
    %2011 = vmatprep.subr.bf16.mxu0 0
    %2012 = vmatpush1.bf16.msra.mxu0 0
    %2013 = vmatprep.subr.bf16.mxu0 0
    %2014 = vmatpush1.bf16.msra.mxu0 0
    %2015 = vmatprep.subr.bf16.mxu0 0
    %2016 = vmatpush1.bf16.msra.mxu0 0
    %2017 = vmatprep.subr.bf16.mxu0 0
    %2018 = vmatpush1.bf16.msra.mxu0 0
    %2019 = vmatprep.subr.bf16.mxu0 0
    %2020 = vmatpush1.bf16.msra.mxu0 0
    %2021 = vmatprep.subr.bf16.mxu0 0
    %2022 = vmatpush1.bf16.msra.mxu0 0
    %2023 = vmatprep.subr.bf16.mxu0 0
    %2024 = vmatpush1.bf16.msra.mxu0 %v2004
    %2025 = vmatprep.subr.bf16.mxu0 0
    %2026 = vmatpush2.bf16.msra.mxu0 0
    %2027 = vmatprep.subr.bf16.mxu0 0
    %2028 = vmatpush2.bf16.msra.mxu0 0
    %2029 = vmatprep.subr.bf16.mxu0 0
    %2030 = vmatpush2.bf16.msra.mxu0 0
    %2031 = vmatprep.subr.bf16.mxu0 0
    %2032 = vmatpush2.bf16.msra.mxu0 0
    %2033 = vmatprep.subr.bf16.mxu0 0
    %2034 = vmatpush2.bf16.msra.mxu0 0
    %2035 = vmatprep.subr.bf16.mxu0 0
    %2036 = vmatpush2.bf16.msra.mxu0 0
    %2037 = vmatprep.subr.bf16.mxu0 0
    %2038 = vmatpush2.bf16.msra.mxu0 0
    %2039 = vmatprep.subr.bf16.mxu0 0
    %2040 = vmatpush2.bf16.msra.mxu0 0
    %2041 = vmatprep.mubr.bf16.mxu0 0
    %2042 = vmatmul.mubr.bf16.gmra.mxu0 %v2007
    %v2043 = vpop.f32.mrf.mxu0
    %v2044 = vadd.f32 0.0, %v2043
    %v2045 = vpop.f32.mrf.mxu0
    %v2046 = vpop.f32.mrf.mxu0
    %v2047 = vadd.f32 0.0, %v2046
    %v2048 = vpop.f32.mrf.mxu0
    %2049 = vdwg.mxu0
    %2050 = vrot.lane.b32.xlu0 %v254, 48
    %v2051 = vpop.permute.xlu0 %2050
    %v2054 = vsel %vm262, %v1812, 0
    %2056 = vmatprep.subr.bf16.mxu0 0
    %2057 = vmatpush1.bf16.msra.mxu0 0
    %2058 = vmatprep.subr.bf16.mxu0 0
    %2059 = vmatpush1.bf16.msra.mxu0 0
    %2060 = vmatprep.subr.bf16.mxu0 0
    %2061 = vmatpush1.bf16.msra.mxu0 0
    %2062 = vmatprep.subr.bf16.mxu0 0
    %2063 = vmatpush1.bf16.msra.mxu0 0
    %2064 = vmatprep.subr.bf16.mxu0 0
    %2065 = vmatpush1.bf16.msra.mxu0 0
    %2066 = vmatprep.subr.bf16.mxu0 0
    %2067 = vmatpush1.bf16.msra.mxu0 0
    %2068 = vmatprep.subr.bf16.mxu0 0
    %2069 = vmatpush1.bf16.msra.mxu0 0
    %2070 = vmatprep.subr.bf16.mxu0 0
    %2071 = vmatpush1.bf16.msra.mxu0 %v2051
    %2072 = vmatprep.subr.bf16.mxu0 0
    %2073 = vmatpush2.bf16.msra.mxu0 0
    %2074 = vmatprep.subr.bf16.mxu0 0
    %2075 = vmatpush2.bf16.msra.mxu0 0
    %2076 = vmatprep.subr.bf16.mxu0 0
    %2077 = vmatpush2.bf16.msra.mxu0 0
    %2078 = vmatprep.subr.bf16.mxu0 0
    %2079 = vmatpush2.bf16.msra.mxu0 0
    %2080 = vmatprep.subr.bf16.mxu0 0
    %2081 = vmatpush2.bf16.msra.mxu0 0
    %2082 = vmatprep.subr.bf16.mxu0 0
    %2083 = vmatpush2.bf16.msra.mxu0 0
    %2084 = vmatprep.subr.bf16.mxu0 0
    %2085 = vmatpush2.bf16.msra.mxu0 0
    %2086 = vmatprep.subr.bf16.mxu0 0
    %2087 = vmatpush2.bf16.msra.mxu0 0
    %2088 = vmatprep.mubr.bf16.mxu0 0
    %2089 = vmatmul.mubr.bf16.gmra.mxu0 %v2054
    %v2090 = vpop.f32.mrf.mxu0
    %v2091 = vadd.f32 0.0, %v2090
    %v2092 = vpop.f32.mrf.mxu0
    %v2093 = vpop.f32.mrf.mxu0
    %v2094 = vadd.f32 0.0, %v2093
    %v2095 = vpop.f32.mrf.mxu0
    %2096 = vdwg.mxu0
    %2097 = vrot.lane.b32.xlu0 %v255, 48
    %v2098 = vpop.permute.xlu0 %2097
    %v2101 = vsel %vm262, %v1813, 0
    %2103 = vmatprep.subr.bf16.mxu0 0
    %2104 = vmatpush1.bf16.msra.mxu0 0
    %2105 = vmatprep.subr.bf16.mxu0 0
    %2106 = vmatpush1.bf16.msra.mxu0 0
    %2107 = vmatprep.subr.bf16.mxu0 0
    %2108 = vmatpush1.bf16.msra.mxu0 0
    %2109 = vmatprep.subr.bf16.mxu0 0
    %2110 = vmatpush1.bf16.msra.mxu0 0
    %2111 = vmatprep.subr.bf16.mxu0 0
    %2112 = vmatpush1.bf16.msra.mxu0 0
    %2113 = vmatprep.subr.bf16.mxu0 0
    %2114 = vmatpush1.bf16.msra.mxu0 0
    %2115 = vmatprep.subr.bf16.mxu0 0
    %2116 = vmatpush1.bf16.msra.mxu0 0
    %2117 = vmatprep.subr.bf16.mxu0 0
    %2118 = vmatpush1.bf16.msra.mxu0 %v2098
    %2119 = vmatprep.subr.bf16.mxu0 0
    %2120 = vmatpush2.bf16.msra.mxu0 0
    %2121 = vmatprep.subr.bf16.mxu0 0
    %2122 = vmatpush2.bf16.msra.mxu0 0
    %2123 = vmatprep.subr.bf16.mxu0 0
    %2124 = vmatpush2.bf16.msra.mxu0 0
    %2125 = vmatprep.subr.bf16.mxu0 0
    %2126 = vmatpush2.bf16.msra.mxu0 0
    %2127 = vmatprep.subr.bf16.mxu0 0
    %2128 = vmatpush2.bf16.msra.mxu0 0
    %2129 = vmatprep.subr.bf16.mxu0 0
    %2130 = vmatpush2.bf16.msra.mxu0 0
    %2131 = vmatprep.subr.bf16.mxu0 0
    %2132 = vmatpush2.bf16.msra.mxu0 0
    %2133 = vmatprep.subr.bf16.mxu0 0
    %2134 = vmatpush2.bf16.msra.mxu0 0
    %2135 = vmatprep.mubr.bf16.mxu0 0
    %2136 = vmatmul.mubr.bf16.gmra.mxu0 %v2101
    %v2137 = vpop.f32.mrf.mxu0
    %v2138 = vadd.f32 0.0, %v2137
    %v2139 = vpop.f32.mrf.mxu0
    %v2140 = vpop.f32.mrf.mxu0
    %v2141 = vadd.f32 0.0, %v2140
    %v2142 = vpop.f32.mrf.mxu0
    %2143 = vdwg.mxu0
    %2144 = vrot.lane.b32.xlu0 %v256, 48
    %v2145 = vpop.permute.xlu0 %2144
    %v2148 = vsel %vm262, %v1814, 0
    %2150 = vmatprep.subr.bf16.mxu0 0
    %2151 = vmatpush1.bf16.msra.mxu0 0
    %2152 = vmatprep.subr.bf16.mxu0 0
    %2153 = vmatpush1.bf16.msra.mxu0 0
    %2154 = vmatprep.subr.bf16.mxu0 0
    %2155 = vmatpush1.bf16.msra.mxu0 0
    %2156 = vmatprep.subr.bf16.mxu0 0
    %2157 = vmatpush1.bf16.msra.mxu0 0
    %2158 = vmatprep.subr.bf16.mxu0 0
    %2159 = vmatpush1.bf16.msra.mxu0 0
    %2160 = vmatprep.subr.bf16.mxu0 0
    %2161 = vmatpush1.bf16.msra.mxu0 0
    %2162 = vmatprep.subr.bf16.mxu0 0
    %2163 = vmatpush1.bf16.msra.mxu0 0
    %2164 = vmatprep.subr.bf16.mxu0 0
    %2165 = vmatpush1.bf16.msra.mxu0 %v2145
    %2166 = vmatprep.subr.bf16.mxu0 0
    %2167 = vmatpush2.bf16.msra.mxu0 0
    %2168 = vmatprep.subr.bf16.mxu0 0
    %2169 = vmatpush2.bf16.msra.mxu0 0
    %2170 = vmatprep.subr.bf16.mxu0 0
    %2171 = vmatpush2.bf16.msra.mxu0 0
    %2172 = vmatprep.subr.bf16.mxu0 0
    %2173 = vmatpush2.bf16.msra.mxu0 0
    %2174 = vmatprep.subr.bf16.mxu0 0
    %2175 = vmatpush2.bf16.msra.mxu0 0
    %2176 = vmatprep.subr.bf16.mxu0 0
    %2177 = vmatpush2.bf16.msra.mxu0 0
    %2178 = vmatprep.subr.bf16.mxu0 0
    %2179 = vmatpush2.bf16.msra.mxu0 0
    %2180 = vmatprep.subr.bf16.mxu0 0
    %2181 = vmatpush2.bf16.msra.mxu0 0
    %2182 = vmatprep.mubr.bf16.mxu0 0
    %2183 = vmatmul.mubr.bf16.gmra.mxu0 %v2148
    %v2184 = vpop.f32.mrf.mxu0
    %v2185 = vadd.f32 0.0, %v2184
    %v2186 = vpop.f32.mrf.mxu0
    %v2187 = vpop.f32.mrf.mxu0
    %v2188 = vadd.f32 0.0, %v2187
    %v2189 = vpop.f32.mrf.mxu0
    %2190 = vdwg.mxu0
    %2207 = vrot.lane.b32.xlu0 %v1856, 16
    %v2208 = vpop.permute.xlu0 %2207
    %2209 = vrot.lane.b32.xlu0 %v1859, 16
    %v2210 = vpop.permute.xlu0 %2209
    %2211 = vrot.lane.b32.xlu0 %v1903, 16
    %v2212 = vpop.permute.xlu0 %2211
    %2213 = vrot.lane.b32.xlu0 %v1906, 16
    %v2214 = vpop.permute.xlu0 %2213
    %2215 = vrot.lane.b32.xlu0 %v1950, 16
    %v2216 = vpop.permute.xlu0 %2215
    %2217 = vrot.lane.b32.xlu0 %v1953, 16
    %v2218 = vpop.permute.xlu0 %2217
    %2219 = vrot.lane.b32.xlu0 %v1997, 16
    %v2220 = vpop.permute.xlu0 %2219
    %2221 = vrot.lane.b32.xlu0 %v2000, 16
    %v2222 = vpop.permute.xlu0 %2221
    %2223 = vrot.lane.b32.xlu0 %v2044, 16
    %v2224 = vpop.permute.xlu0 %2223
    %2225 = vrot.lane.b32.xlu0 %v2047, 16
    %v2226 = vpop.permute.xlu0 %2225
    %2227 = vrot.lane.b32.xlu0 %v2091, 16
    %v2228 = vpop.permute.xlu0 %2227
    %2229 = vrot.lane.b32.xlu0 %v2094, 16
    %v2230 = vpop.permute.xlu0 %2229
    %2231 = vrot.lane.b32.xlu0 %v2138, 16
    %v2232 = vpop.permute.xlu0 %2231
    %2233 = vrot.lane.b32.xlu0 %v2141, 16
    %v2234 = vpop.permute.xlu0 %2233
    %2235 = vrot.lane.b32.xlu0 %v2185, 16
    %v2236 = vpop.permute.xlu0 %2235
    %2237 = vrot.lane.b32.xlu0 %v2188, 16
    %v2238 = vpop.permute.xlu0 %2237
    %v2255 = vsel %vm262, %v885, %v2208
    %v2256 = vsel %vm262, %v888, %v2210
    %v2257 = vsel %vm262, %v932, %v2212
    %v2258 = vsel %vm262, %v935, %v2214
    %v2259 = vsel %vm262, %v979, %v2216
    %v2260 = vsel %vm262, %v982, %v2218
    %v2261 = vsel %vm262, %v1026, %v2220
    %v2262 = vsel %vm262, %v1029, %v2222
    %v2263 = vsel %vm262, %v1073, %v2224
    %v2264 = vsel %vm262, %v1076, %v2226
    %v2265 = vsel %vm262, %v1120, %v2228
    %v2266 = vsel %vm262, %v1123, %v2230
    %v2267 = vsel %vm262, %v1167, %v2232
    %v2268 = vsel %vm262, %v1170, %v2234
    %v2269 = vsel %vm262, %v1214, %v2236
    %v2270 = vsel %vm262, %v1217, %v2238
    %v2271 = vpack.c.bf16 %v2256, %v2255
    %v2272 = vpack.c.bf16 %v2258, %v2257
    %v2273 = vpack.c.bf16 %v2260, %v2259
    %v2274 = vpack.c.bf16 %v2262, %v2261
    %v2275 = vpack.c.bf16 %v2264, %v2263
    %v2276 = vpack.c.bf16 %v2266, %v2265
    %v2277 = vpack.c.bf16 %v2268, %v2267
    %v2278 = vpack.c.bf16 %v2270, %v2269
    %v2279 = vld [vmem:[#allocation8] sm:$0xf]
    %v2280 = vld [vmem:[#allocation8 + $0x4] sm:$0xf]
    %v2281 = vld [vmem:[#allocation8 + $0x8] sm:$0xf]
    %v2282 = vld [vmem:[#allocation8 + $0xc] sm:$0xf]
    %v2283 = vld [vmem:[%s5] sm:$0x1]
    %v2285 = vlaneseq
    %v2286 = vshrl.u32 %v2285, 7
    %v2287 = vsub.s32 0, %v2286
    %v2288 = vrot.slane %v2283, %v2287
    %v2294 = vunpack.c.l.b16 %v2279
    %v2295 = vunpack.c.l.b16 %v2280
    %v2296 = vunpack.c.l.b16 %v2281
    %v2297 = vunpack.c.l.b16 %v2282
    %v2298 = vpack.c.b16 %v2295, %v2294
    %v2299 = vpack.c.b16 %v2297, %v2296
    %v2303 = vsel %vm127, %v2271, 0
    %v2306 = vsel %vm127, %v2272, 0
    %v2309 = vsel %vm127, %v2273, 0
    %v2312 = vsel %vm127, %v2274, 0
    %v2315 = vsel %vm127, %v2275, 0
    %v2318 = vsel %vm127, %v2276, 0
    %v2321 = vsel %vm127, %v2277, 0
    %v2324 = vsel %vm127, %v2278, 0
    %2326 = vmatprep.subr.bf16.mxu0 0
    %2327 = vmatpush1.bf16.msra.mxu0 0
    %2328 = vmatprep.subr.bf16.mxu0 0
    %2329 = vmatpush1.bf16.msra.mxu0 0
    %2330 = vmatprep.subr.bf16.mxu0 0
    %2331 = vmatpush1.bf16.msra.mxu0 0
    %2332 = vmatprep.subr.bf16.mxu0 0
    %2333 = vmatpush1.bf16.msra.mxu0 0
    %2334 = vmatprep.subr.bf16.mxu0 0
    %2335 = vmatpush1.bf16.msra.mxu0 0
    %2336 = vmatprep.subr.bf16.mxu0 0
    %2337 = vmatpush1.bf16.msra.mxu0 0
    %2338 = vmatprep.subr.bf16.mxu0 0
    %2339 = vmatpush1.bf16.msra.mxu0 %v2299
    %2340 = vmatprep.subr.bf16.mxu0 0
    %2341 = vmatpush1.bf16.msra.mxu0 %v2298
    %2342 = vmatprep.subr.bf16.mxu0 0
    %2343 = vmatpush2.bf16.msra.mxu0 0
    %2344 = vmatprep.subr.bf16.mxu0 0
    %2345 = vmatpush2.bf16.msra.mxu0 0
    %2346 = vmatprep.subr.bf16.mxu0 0
    %2347 = vmatpush2.bf16.msra.mxu0 0
    %2348 = vmatprep.subr.bf16.mxu0 0
    %2349 = vmatpush2.bf16.msra.mxu0 0
    %2350 = vmatprep.subr.bf16.mxu0 0
    %2351 = vmatpush2.bf16.msra.mxu0 0
    %2352 = vmatprep.subr.bf16.mxu0 0
    %2353 = vmatpush2.bf16.msra.mxu0 0
    %2354 = vmatprep.subr.bf16.mxu0 0
    %2355 = vmatpush2.bf16.msra.mxu0 0
    %2356 = vmatprep.subr.bf16.mxu0 0
    %2357 = vmatpush2.bf16.msra.mxu0 0
    %2358 = vmatprep.mubr.bf16.mxu0 0
    %2359 = vmatmul.mubr.bf16.gmra.mxu0 %v2303
    %v2360 = vpop.f32.mrf.mxu0
    %v2361 = vadd.f32 %v2288, %v2360
    %v2362 = vpop.f32.mrf.mxu0
    %v2363 = vpop.f32.mrf.mxu0
    %v2364 = vadd.f32 %v2288, %v2363
    %v2365 = vpop.f32.mrf.mxu0
    %2366 = vmatprep.mubr.bf16.mxu0 0
    %2367 = vmatmul.mubr.bf16.gmra.mxu0 %v2306
    %v2368 = vpop.f32.mrf.mxu0
    %v2369 = vadd.f32 %v2288, %v2368
    %v2370 = vpop.f32.mrf.mxu0
    %v2371 = vpop.f32.mrf.mxu0
    %v2372 = vadd.f32 %v2288, %v2371
    %v2373 = vpop.f32.mrf.mxu0
    %2374 = vmatprep.mubr.bf16.mxu0 0
    %2375 = vmatmul.mubr.bf16.gmra.mxu0 %v2309
    %v2376 = vpop.f32.mrf.mxu0
    %v2377 = vadd.f32 %v2288, %v2376
    %v2378 = vpop.f32.mrf.mxu0
    %v2379 = vpop.f32.mrf.mxu0
    %v2380 = vadd.f32 %v2288, %v2379
    %v2381 = vpop.f32.mrf.mxu0
    %2382 = vmatprep.mubr.bf16.mxu0 0
    %2383 = vmatmul.mubr.bf16.gmra.mxu0 %v2312
    %v2384 = vpop.f32.mrf.mxu0
    %v2385 = vadd.f32 %v2288, %v2384
    %v2386 = vpop.f32.mrf.mxu0
    %v2387 = vpop.f32.mrf.mxu0
    %v2388 = vadd.f32 %v2288, %v2387
    %v2389 = vpop.f32.mrf.mxu0
    %2390 = vmatprep.mubr.bf16.mxu0 0
    %2391 = vmatmul.mubr.bf16.gmra.mxu0 %v2315
    %v2392 = vpop.f32.mrf.mxu0
    %v2393 = vadd.f32 %v2288, %v2392
    %v2394 = vpop.f32.mrf.mxu0
    %v2395 = vpop.f32.mrf.mxu0
    %v2396 = vadd.f32 %v2288, %v2395
    %v2397 = vpop.f32.mrf.mxu0
    %2398 = vmatprep.mubr.bf16.mxu0 0
    %2399 = vmatmul.mubr.bf16.gmra.mxu0 %v2318
    %v2400 = vpop.f32.mrf.mxu0
    %v2401 = vadd.f32 %v2288, %v2400
    %v2402 = vpop.f32.mrf.mxu0
    %v2403 = vpop.f32.mrf.mxu0
    %v2404 = vadd.f32 %v2288, %v2403
    %v2405 = vpop.f32.mrf.mxu0
    %2406 = vmatprep.mubr.bf16.mxu0 0
    %2407 = vmatmul.mubr.bf16.gmra.mxu0 %v2321
    %v2408 = vpop.f32.mrf.mxu0
    %v2409 = vadd.f32 %v2288, %v2408
    %v2410 = vpop.f32.mrf.mxu0
    %v2411 = vpop.f32.mrf.mxu0
    %v2412 = vadd.f32 %v2288, %v2411
    %v2413 = vpop.f32.mrf.mxu0
    %2414 = vmatprep.mubr.bf16.mxu0 0
    %2415 = vmatmul.mubr.bf16.gmra.mxu0 %v2324
    %v2416 = vpop.f32.mrf.mxu0
    %v2417 = vadd.f32 %v2288, %v2416
    %v2418 = vpop.f32.mrf.mxu0
    %v2419 = vpop.f32.mrf.mxu0
    %v2420 = vadd.f32 %v2288, %v2419
    %v2421 = vpop.f32.mrf.mxu0
    %2422 = vdwg.mxu0
    %2423 = vst.msk [vmem:[#allocation10] sm:$0xff] %vm127, %v2361
    %2424 = vst.msk [vmem:[#allocation10 + $0x8] sm:$0xff] %vm127, %v2364
    %2425 = vst.msk [vmem:[#allocation10 + $0x10] sm:$0xff] %vm127, %v2369
    %2426 = vst.msk [vmem:[#allocation10 + $0x18] sm:$0xff] %vm127, %v2372
    %2427 = vst.msk [vmem:[#allocation10 + $0x20] sm:$0xff] %vm127, %v2377
    %2428 = vst.msk [vmem:[#allocation10 + $0x28] sm:$0xff] %vm127, %v2380
    %2429 = vst.msk [vmem:[#allocation10 + $0x30] sm:$0xff] %vm127, %v2385
    %2430 = vst.msk [vmem:[#allocation10 + $0x38] sm:$0xff] %vm127, %v2388
    %2431 = vst.msk [vmem:[#allocation10 + $0x40] sm:$0xff] %vm127, %v2393
    %2432 = vst.msk [vmem:[#allocation10 + $0x48] sm:$0xff] %vm127, %v2396
    %2433 = vst.msk [vmem:[#allocation10 + $0x50] sm:$0xff] %vm127, %v2401
    %2434 = vst.msk [vmem:[#allocation10 + $0x58] sm:$0xff] %vm127, %v2404
    %2435 = vst.msk [vmem:[#allocation10 + $0x60] sm:$0xff] %vm127, %v2409
    %2436 = vst.msk [vmem:[#allocation10 + $0x68] sm:$0xff] %vm127, %v2412
    %2437 = vst.msk [vmem:[#allocation10 + $0x70] sm:$0xff] %vm127, %v2417
    %2438 = vst.msk [vmem:[#allocation10 + $0x78] sm:$0xff] %vm127, %v2420
    // Predicated region
    $region42: #{tpu_custom_call.1} parent=1 // pred_check
      _
    $region43: #{tpu_custom_call.1} parent=1 // pred_check_branch
      %2440 = sbr.rel (0) target = $region45
    $region44: #{tpu_custom_call.1} parent=1 // pred_region
      %s2442 = ssub.s32 2048, 2048
      %2443 = vsyncadd [#allocation4], %s2442
      %s2444 = sshll.u32 [#allocation10], 4
      %s2445 = int_to_ptr.vmem [resolvable:$true] %s2444
      %2450 = dma.vmem_to_hbm [thread:$0]  %s2445, 2048, %s6, [#allocation4], 128, 128, 8
    $region45: #{tpu_custom_call.1} parent=1 // pred_fallthru
      _
    // Predicated region
    $region46: #{tpu_custom_call.1} parent=1 // pred_check
      _
    $region47: #{tpu_custom_call.1} parent=1 // pred_check_branch
      %2452 = sbr.rel (0) target = $region49
    $region48: #{tpu_custom_call.1} parent=1 // pred_region
      %2453 = dma.done [#allocation4], 2048
    $region49: #{tpu_custom_call.1} parent=1 // pred_fallthru
      _
    %2454 = vsyncpa [#allocation3], 1
    %2455 = vsyncpa [#allocation6], 1
    %2456 = vsyncpa [#allocation9], 1
    %2457 = vsyncpa [#allocation4], 1

</llo_original>
